<compile_context>
chip_gen: v7x
topology: tpu7x:2x2x1
jax: 0.10.0
libtpu: 0.0.40
codegen_flags: <defaults>
</compile_context>

<pallas_src>
import math
import functools

import jax
import jax.numpy as jnp
from jax.experimental import pallas as pl
from jax.experimental.pallas import tpu as pltpu

LIF_DECAY = 1.0 / (1.0 + math.exp(-1.0))   # torch.sigmoid(tensor(1.0))
BN_EPS = 1e-5


def _round_up(x, m):
    return (x + m - 1) // m * m


def _pick_batch_block(n, max_nb=8):
    """Largest Nb <= max_nb dividing n while keeping >= 2 grid steps (megacore)."""
    nb = min(n, max_nb)
    while nb > 1 and (n % nb != 0 or n // nb < 2):
        nb -= 1
    return nb


# -----------------------------------------------------------------------------
# Fused kernel: LCB1 -> LCB2 -> MaxPool(2)      (Nb batch images per grid step)
# -----------------------------------------------------------------------------
def ems_block2_kernel(x_ref, w1_ref, w2_ref, bias_ref,
                      mem1_ref, spk1_ref, mem2_ref, spk2_ref, pool_ref,
                      mem1_out, spk1_out, mem2_out, spk2_out, pool_out,
                      s1pad, slab1, slab2, *, H, W, Nb):
    Wg = W + 1                      # row stride incl. the zero guard column
    HWg = H * Wg                    # flat spatial length (guard lanes included)
    OFF = W + 2                     # flat offset of pixel (0, 0) in padded axis
    Lp = s1pad.shape[-1]
    Cin = x_ref.shape[1]
    Cout = mem1_ref.shape[1]

    # Static window starts of the 9 conv taps (dy, dx).  Thanks to the zero
    # guard column, every tap is one contiguous, unmasked window.
    starts = [OFF + dy * Wg + dx for dy in (-1, 0, 1) for dx in (-1, 0, 1)]

    # Guard-lane mask (w == W), built once per grid step.
    col = jax.lax.broadcasted_iota(jnp.int32, (1, HWg), 1) % Wg
    valid = col != W

    # Zero only the guard strips of the spike1 re-pad scratch.  The interior
    # [OFF, OFF + HWg) is fully rewritten for every image.  We do NOT gate this
    # on program_id == 0: with "parallel" semantics each TensorCore owns its own
    # scratch instance and its own slice of the grid.
    s1pad[:, pl.ds(0, OFF)] = jnp.zeros((Cout, OFF), s1pad.dtype)
    tail = Lp - (OFF + HWg)
    s1pad[:, pl.ds(OFF + HWg, tail)] = jnp.zeros((Cout, tail), s1pad.dtype)

    def conv(slab_ref, read, cin, w_ref, bias):
        # Fused im2col: stack the 9 tap windows along K in a VMEM scratch.
        for t, s in enumerate(starts):
            slab_ref[pl.ds(t * cin, cin), :] = read(s)
        # One K = 9*cin MXU matmul (BN scale pre-folded into w) + folded bias.
        return jnp.dot(w_ref[...], slab_ref[...],
                       preferred_element_type=jnp.float32) + bias

    def lif(mem, spk_prev, i_in):
        u = LIF_DECAY * mem * (1.0 - spk_prev.astype(jnp.float32)) + i_in
        # Heaviside with value 1 at 0 (u >= 0).  Guard lanes are forced to 0 so
        # they stay zero for conv2's guard-column windows and the pool matmul.
        s = jnp.where(jnp.logical_and(u >= 0.0, valid), 1.0, 0.0)
        return u, s.astype(jnp.bfloat16)

    for b in range(Nb):             # unrolled batch-block loop
        # ---- LCB1: conv(x) + folded BN + LIF --------------------------------
        i1 = conv(slab1, lambda s: x_ref[b, :, pl.ds(s, HWg)],
                  Cin, w1_ref, bias_ref[0])
        u1, s1 = lif(mem1_ref[b], spk1_ref[b], i1)
        mem1_out[b] = u1
        spk1_out[b] = s1

        # Re-pad spike1 into the guard-column VMEM buffer (never touches HBM).
        s1pad[:, pl.ds(OFF, HWg)] = s1

        # ---- LCB2: conv(spike1) + folded BN + LIF ---------------------------
        i2 = conv(slab2, lambda s: s1pad[:, pl.ds(s, HWg)],
                  Cout, w2_ref, bias_ref[1])
        u2, s2 = lif(mem2_ref[b], spk2_ref[b], i2)
        mem2_out[b] = u2
        spk2_out[b] = s2

        # ---- MaxPool2d(2): spikes are exactly {0,1} -> max == OR == (sum > 0).
        # pool_ref[p, q] = 1 iff guard-layout pixel p lies in pooled cell q.
        # TODO(synk): switch to an XLU roll+add pool at large H*W, where this
        # (HWg, HWg/4) membership matrix would stress v7x's 64 MiB VMEM.
        cnt = jnp.dot(s2, pool_ref[...], preferred_element_type=jnp.float32)
        pool_out[b] = (cnt > 0.5).astype(pool_out.dtype)


# -----------------------------------------------------------------------------
# pallas_call wrapper
# -----------------------------------------------------------------------------
def ems_block2_pallas(xpad, w1, w2, bias, m1, s1, m2, s2, pool_mat, *, H, W, Nb):
    N, Cin, Lp = xpad.shape
    Cout = w1.shape[0]
    G = N // Nb
    HWg = H * (W + 1)
    HpWp = (H // 2) * (W // 2)

    kernel = functools.partial(ems_block2_kernel, H=H, W=W, Nb=Nb)

    state_block = (Nb, Cout, HWg)
    state_map = lambda g: (g, 0, 0)
    const2d = lambda g: (0, 0)
    const3d = lambda g: (0, 0, 0)

    out_shape = (
        jax.ShapeDtypeStruct((N, Cout, HWg), jnp.float32),    # mem1'
        jax.ShapeDtypeStruct((N, Cout, HWg), jnp.bfloat16),   # spike1'
        jax.ShapeDtypeStruct((N, Cout, HWg), jnp.float32),    # mem2'
        jax.ShapeDtypeStruct((N, Cout, HWg), jnp.bfloat16),   # spike2'
        jax.ShapeDtypeStruct((N, Cout, HpWp), jnp.bfloat16),  # pooled (emitted once)
    )

    return pl.pallas_call(
        kernel,
        out_shape=out_shape,
        grid=(G,),
        in_specs=[
            pl.BlockSpec((Nb, Cin, Lp), state_map),          # padded x (bf16)
            pl.BlockSpec((Cout, 9 * Cin), const2d),          # w1 (BN1 folded)
            pl.BlockSpec((Cout, 9 * Cout), const2d),         # w2 (BN2 folded)
            pl.BlockSpec((2, Cout, 1), const3d),             # biases (BN1, BN2)
            pl.BlockSpec(state_block, state_map),            # mem1   (f32)
            pl.BlockSpec(state_block, state_map),            # spike1 (bf16)
            pl.BlockSpec(state_block, state_map),            # mem2   (f32)
            pl.BlockSpec(state_block, state_map),            # spike2 (bf16)
            pl.BlockSpec((HWg, HpWp), const2d),              # pool membership
        ],
        out_specs=[
            pl.BlockSpec(state_block, state_map),
            pl.BlockSpec(state_block, state_map),
            pl.BlockSpec(state_block, state_map),
            pl.BlockSpec(state_block, state_map),
            pl.BlockSpec((Nb, Cout, HpWp), state_map),
        ],
        scratch_shapes=[
            pltpu.VMEM((Cout, Lp), jnp.bfloat16),            # spike1 re-pad
            pltpu.VMEM((9 * Cin, HWg), jnp.bfloat16),        # im2col slab conv1
            pltpu.VMEM((9 * Cout, HWg), jnp.bfloat16),       # im2col slab conv2
        ],
        input_output_aliases={4: 0, 5: 1, 6: 2, 7: 3},
        compiler_params=pltpu.CompilerParams(
            dimension_semantics=("parallel",),
            vmem_limit_bytes=32 * 1024 * 1024),
    )(xpad, w1, w2, bias, m1, s1, m2, s2, pool_mat)


# -----------------------------------------------------------------------------
# Glue: BN folding, layouts, pool matrix, full EMS_Block2 forward (NCHW I/O)
# -----------------------------------------------------------------------------
def fold_bn_into_conv(w_oihw, gamma, beta, mean, var):
    """OIHW conv weight + inference BN -> (Cout, 9*Cin) bf16 weight, f32 bias."""
    scale = gamma / jnp.sqrt(var + BN_EPS)                    # (Cout,)
    bias = beta - mean * scale                                # (Cout,)
    cout, cin = w_oihw.shape[0], w_oihw.shape[1]
    # K ordering must match the im2col slab: tap-major (t = ky*3 + kx), c minor.
    w2d = jnp.transpose(w_oihw, (0, 2, 3, 1)).reshape(cout, 9 * cin)
    w2d = (scale[:, None] * w2d).astype(jnp.bfloat16)         # fold in f32, cast last
    return w2d, bias.astype(jnp.float32).reshape(cout, 1)


def make_pool_matrix(H, W, dtype):
    """(H*(W+1), (H//2)*(W//2)) 0/1 membership of guard-layout pixels in 2x2 cells."""
    Wg, Hp, Wp = W + 1, H // 2, W // 2
    p = jnp.arange(H * Wg)
    h, w = p // Wg, p % Wg
    cell = jnp.where(w < W, (h // 2) * Wp + w // 2, -1)       # guard lanes -> none
    return (cell[:, None] == jnp.arange(Hp * Wp)[None, :]).astype(dtype)


def to_guard_layout(a):
    """(N, C, H, W) -> (N, C, H*(W+1)) with a zero guard column after each row."""
    N, C, H, W = a.shape
    return jnp.pad(a, ((0, 0), (0, 0), (0, 0), (0, 1))).reshape(N, C, H * (W + 1))


def from_guard_layout(a, H, W):
    """(N, C, H*(W+1)) -> (N, C, H, W), dropping the guard column."""
    N, C, _ = a.shape
    return a.reshape(N, C, H, W + 1)[..., :W]


@jax.jit
def ems_block2_forward(x, mem1, spike1, mem2, spike2, params):
    """NCHW interface matching the PyTorch module (inference-mode BatchNorm).

    Spike states/outputs are bf16 (values exactly {0, 1}); mem states are f32.
    TODO(synk): for multi-timestep loops, keep mem/spike in the internal
    guard-column (N, C, H*(W+1)) layout between calls to skip the pad/slice
    repacks done here.
    """
    N, Cin, H, W = x.shape
    Cout = params["w1"].shape[0]
    Wg = W + 1
    HWg = H * Wg
    Hp, Wp = H // 2, W // 2
    OFF = W + 2
    Lp = _round_up(OFF + HWg + W + 2, 128)     # lane-rounded padded flat length
    Nb = _pick_batch_block(N)

    # conv input: NCHW -> guard-column flat layout -> zero-pad the flat axis.
    xg = to_guard_layout(x.astype(jnp.bfloat16))
    xpad = jnp.pad(xg, ((0, 0), (0, 0), (OFF, Lp - OFF - HWg)))

    w1, bias1 = fold_bn_into_conv(params["w1"], params["g1"], params["b1"],
                                  params["rm1"], params["rv1"])
    w2, bias2 = fold_bn_into_conv(params["w2"], params["g2"], params["b2"],
                                  params["rm2"], params["rv2"])
    bias = jnp.stack([bias1, bias2], axis=0)                  # (2, Cout, 1)
    pool_mat = make_pool_matrix(H, W, jnp.bfloat16)

    m1 = to_guard_layout(mem1.astype(jnp.float32))
    s1 = to_guard_layout(spike1.astype(jnp.bfloat16))
    m2 = to_guard_layout(mem2.astype(jnp.float32))
    s2 = to_guard_layout(spike2.astype(jnp.bfloat16))

    mem1_n, spk1_n, mem2_n, spk2_n, pooled = ems_block2_pallas(
        xpad, w1, w2, bias, m1, s1, m2, s2, pool_mat, H=H, W=W, Nb=Nb)

    # TODO(synk): the reference torch.cat([pooled, spike2], dim=1) mixes H/2 and
    # H spatial sizes and is invalid in PyTorch; as in the previous version the
    # pooled map is duplicated along the channel dim instead.
    pooled = pooled.reshape(N, Cout, Hp, Wp).astype(jnp.float32)
    cat_out = jnp.concatenate([pooled, pooled], axis=1)

    return (cat_out,
            from_guard_layout(mem1_n, H, W),
            from_guard_layout(spk1_n, H, W),
            from_guard_layout(mem2_n, H, W),
            from_guard_layout(spk2_n, H, W))


# -----------------------------------------------------------------------------
# Deterministic parameter / input construction + smoke test
# -----------------------------------------------------------------------------
def make_params(key, cin, cout):
    ks = jax.random.split(key, 10)
    std1 = math.sqrt(2.0 / (9 * cin))
    std2 = math.sqrt(2.0 / (9 * cout))
    return {
        # conv weights, PyTorch OIHW layout
        "w1": jax.random.normal(ks[0], (cout, cin, 3, 3), jnp.float32) * std1,
        "w2": jax.random.normal(ks[1], (cout, cout, 3, 3), jnp.float32) * std2,
        # BatchNorm1 (inference mode)
        "g1": 1.0 + 0.1 * jax.random.normal(ks[2], (cout,), jnp.float32),
        "b1": 0.1 * jax.random.normal(ks[3], (cout,), jnp.float32),
        "rm1": 0.1 * jax.random.normal(ks[4], (cout,), jnp.float32),
        "rv1": 1.0 + 0.1 * jax.random.uniform(ks[5], (cout,), jnp.float32),
        # BatchNorm2
        "g2": 1.0 + 0.1 * jax.random.normal(ks[6], (cout,), jnp.float32),
        "b2": 0.1 * jax.random.normal(ks[7], (cout,), jnp.float32),
        "rm2": 0.1 * jax.random.normal(ks[8], (cout,), jnp.float32),
        "rv2": 1.0 + 0.1 * jax.random.uniform(ks[9], (cout,), jnp.float32),
    }


if __name__ == "__main__":
    N, Cin, Cout, H, W = 2, 4, 8, 16, 16

    key = jax.random.PRNGKey(0)
    kx, km1, ks1, km2, ks2, kp = jax.random.split(key, 6)

    x = jax.random.normal(kx, (N, Cin, H, W), jnp.float32)           # NCHW
    mem1 = 0.1 * jax.random.normal(km1, (N, Cout, H, W), jnp.float32)
    spike1 = (jax.random.uniform(ks1, (N, Cout, H, W)) < 0.5).astype(jnp.float32)
    mem2 = 0.1 * jax.random.normal(km2, (N, Cout, H, W), jnp.float32)
    spike2 = (jax.random.uniform(ks2, (N, Cout, H, W)) < 0.5).astype(jnp.float32)

    params = make_params(kp, Cin, Cout)

    out = ems_block2_forward(x, mem1, spike1, mem2, spike2, params)
    jax.block_until_ready(out)

    cat_out, m1o, s1o, m2o, s2o = out
    assert cat_out.shape == (N, 2 * Cout, H // 2, W // 2)
    assert m1o.shape == s1o.shape == m2o.shape == s2o.shape == (N, Cout, H, W)
    assert bool(jnp.all((s1o == 0) | (s1o == 1)))
    assert bool(jnp.all((s2o == 0) | (s2o == 1)))

    print("KERNEL_OK")
</pallas_src>

<mosaic_0001>
module attributes {stable_mosaic.version = 11 : i64} {
  func.func @ems_block2_kernel(%arg0: i32, %arg1: memref<1x4x384xbf16, #tpu.memory_space<vmem>>, %arg2: memref<8x36xbf16, #tpu.memory_space<vmem>>, %arg3: memref<8x72xbf16, #tpu.memory_space<vmem>>, %arg4: memref<2x8x1xf32, #tpu.memory_space<vmem>>, %arg5: memref<1x8x272xf32, #tpu.memory_space<vmem>>, %arg6: memref<1x8x272xbf16, #tpu.memory_space<vmem>>, %arg7: memref<1x8x272xf32, #tpu.memory_space<vmem>>, %arg8: memref<1x8x272xbf16, #tpu.memory_space<vmem>>, %arg9: memref<272x64xbf16, #tpu.memory_space<vmem>>, %arg10: memref<1x8x272xf32, #tpu.memory_space<vmem>>, %arg11: memref<1x8x272xbf16, #tpu.memory_space<vmem>>, %arg12: memref<1x8x272xf32, #tpu.memory_space<vmem>>, %arg13: memref<1x8x272xbf16, #tpu.memory_space<vmem>>, %arg14: memref<1x8x64xbf16, #tpu.memory_space<vmem>>, %arg15: memref<8x384xbf16, #tpu.memory_space<vmem>>, %arg16: memref<36x272xbf16, #tpu.memory_space<vmem>>, %arg17: memref<72x272xbf16, #tpu.memory_space<vmem>>) attributes {dimension_semantics = [#tpu.dimension_semantics<parallel>], iteration_bounds = array<i64: 2>, scalar_prefetch = 0 : i64, scratch_operands = 3 : i64, tpu.core_type = #tpu.core_type<tc>, window_params = [{transform_indices = @transform_0, window_bounds = array<i64: 1, 4, 384>}, {pipeline_mode = #tpu.pipeline_mode<synchronous>, transform_indices = @transform_1, window_bounds = array<i64: 8, 36>}, {pipeline_mode = #tpu.pipeline_mode<synchronous>, transform_indices = @transform_2, window_bounds = array<i64: 8, 72>}, {pipeline_mode = #tpu.pipeline_mode<synchronous>, transform_indices = @transform_3, window_bounds = array<i64: 2, 8, 1>}, {transform_indices = @transform_4, window_bounds = array<i64: 1, 8, 272>}, {transform_indices = @transform_5, window_bounds = array<i64: 1, 8, 272>}, {transform_indices = @transform_6, window_bounds = array<i64: 1, 8, 272>}, {transform_indices = @transform_7, window_bounds = array<i64: 1, 8, 272>}, {pipeline_mode = #tpu.pipeline_mode<synchronous>, transform_indices = @transform_8, window_bounds = array<i64: 272, 64>}, {transform_indices = @transform_9, window_bounds = array<i64: 1, 8, 272>}, {transform_indices = @transform_10, window_bounds = array<i64: 1, 8, 272>}, {transform_indices = @transform_11, window_bounds = array<i64: 1, 8, 272>}, {transform_indices = @transform_12, window_bounds = array<i64: 1, 8, 272>}, {transform_indices = @transform_13, window_bounds = array<i64: 1, 8, 64>}]} {
    %0 = tpu.iota {dimensions = array<i32: 1>} : vector<1x272xi32>
    %c17_i32 = arith.constant 17 : i32
    %c0_i32 = arith.constant 0 : i32
    %1 = arith.cmpi eq, %c17_i32, %c0_i32 : i32
    %c1_i32 = arith.constant 1 : i32
    %2 = arith.select %1, %c1_i32, %c17_i32 : i32
    %3 = vector.broadcast %2 : i32 to vector<1x272xi32>
    %4 = arith.remsi %0, %3 : vector<1x272xi32>
    %c0_i32_0 = arith.constant 0 : i32
    %5 = vector.broadcast %c0_i32_0 : i32 to vector<1x272xi32>
    %6 = arith.cmpi ne, %4, %5 : vector<1x272xi32>
    %c0_i32_1 = arith.constant 0 : i32
    %7 = vector.broadcast %c0_i32_1 : i32 to vector<1x272xi32>
    %8 = arith.cmpi slt, %4, %7 : vector<1x272xi32>
    %c0_i32_2 = arith.constant 0 : i32
    %9 = arith.cmpi slt, %2, %c0_i32_2 : i32
    %10 = vector.broadcast %9 : i1 to vector<1x272xi1>
    %11 = vector.broadcast %10 : vector<1x272xi1> to vector<1x272xi1>
    %12 = arith.xori %8, %11 : vector<1x272xi1>
    %13 = arith.andi %12, %6 : vector<1x272xi1>
    %14 = vector.broadcast %2 : i32 to vector<1x272xi32>
    %15 = arith.addi %4, %14 : vector<1x272xi32>
    %16 = arith.select %13, %15, %4 : vector<1x272xi1>, vector<1x272xi32>
    %c16_i32 = arith.constant 16 : i32
    %17 = vector.broadcast %c16_i32 : i32 to vector<1x272xi32>
    %18 = arith.cmpi ne, %16, %17 : vector<1x272xi32>
    %cst = arith.constant 0.000000e+00 : bf16
    %19 = vector.broadcast %cst : bf16 to vector<8x18xbf16>
    %c0 = arith.constant 0 : index
    %c0_3 = arith.constant 0 : index
    %20 = vector.load %arg15[%c0, %c0_3] : memref<8x384xbf16, #tpu.memory_space<vmem>>, vector<8x18xbf16>
    tpu.vector_store %arg15[%c0, %c0_3], %19 {strides = array<i32>} : memref<8x384xbf16, #tpu.memory_space<vmem>>, vector<8x18xbf16>,
    %cst_4 = arith.constant 0.000000e+00 : bf16
    %21 = vector.broadcast %cst_4 : bf16 to vector<8x94xbf16>
    %c0_5 = arith.constant 0 : index
    %c290 = arith.constant 290 : index
    %22 = vector.load %arg15[%c0_5, %c290] : memref<8x384xbf16, #tpu.memory_space<vmem>>, vector<8x94xbf16>
    tpu.vector_store %arg15[%c0_5, %c290], %21 {strides = array<i32>} : memref<8x384xbf16, #tpu.memory_space<vmem>>, vector<8x94xbf16>,
    %c0_6 = arith.constant 0 : index
    %c0_7 = arith.constant 0 : index
    %c0_8 = arith.constant 0 : index
    %23 = vector.load %arg4[%c0_6, %c0_7, %c0_8] : memref<2x8x1xf32, #tpu.memory_space<vmem>>, vector<1x8x1xf32>
    %24 = vector.shape_cast %23 : vector<1x8x1xf32> to vector<8x1xf32>
    %c0_9 = arith.constant 0 : index
    %c0_10 = arith.constant 0 : index
    %c0_11 = arith.constant 0 : index
    %25 = vector.load %arg1[%c0_9, %c0_10, %c0_11] : memref<1x4x384xbf16, #tpu.memory_space<vmem>>, vector<1x4x272xbf16>
    %26 = vector.shape_cast %25 : vector<1x4x272xbf16> to vector<4x272xbf16>
    %c0_12 = arith.constant 0 : index
    %c0_13 = arith.constant 0 : index
    %27 = vector.load %arg16[%c0_12, %c0_13] : memref<36x272xbf16, #tpu.memory_space<vmem>>, vector<4x272xbf16>
    tpu.vector_store %arg16[%c0_12, %c0_13], %26 {strides = array<i32>} : memref<36x272xbf16, #tpu.memory_space<vmem>>, vector<4x272xbf16>,
    %c0_14 = arith.constant 0 : index
    %c0_15 = arith.constant 0 : index
    %c1 = arith.constant 1 : index
    %28 = vector.load %arg1[%c0_14, %c0_15, %c1] : memref<1x4x384xbf16, #tpu.memory_space<vmem>>, vector<1x4x272xbf16>
    %29 = vector.shape_cast %28 : vector<1x4x272xbf16> to vector<4x272xbf16>
    %c4 = arith.constant 4 : index
    %c0_16 = arith.constant 0 : index
    %30 = vector.load %arg16[%c4, %c0_16] : memref<36x272xbf16, #tpu.memory_space<vmem>>, vector<4x272xbf16>
    tpu.vector_store %arg16[%c4, %c0_16], %29 {strides = array<i32>} : memref<36x272xbf16, #tpu.memory_space<vmem>>, vector<4x272xbf16>,
    %c0_17 = arith.constant 0 : index
    %c0_18 = arith.constant 0 : index
    %c2 = arith.constant 2 : index
    %31 = vector.load %arg1[%c0_17, %c0_18, %c2] : memref<1x4x384xbf16, #tpu.memory_space<vmem>>, vector<1x4x272xbf16>
    %32 = vector.shape_cast %31 : vector<1x4x272xbf16> to vector<4x272xbf16>
    %c8 = arith.constant 8 : index
    %c0_19 = arith.constant 0 : index
    %33 = vector.load %arg16[%c8, %c0_19] : memref<36x272xbf16, #tpu.memory_space<vmem>>, vector<4x272xbf16>
    tpu.vector_store %arg16[%c8, %c0_19], %32 {strides = array<i32>} : memref<36x272xbf16, #tpu.memory_space<vmem>>, vector<4x272xbf16>,
    %c0_20 = arith.constant 0 : index
    %c0_21 = arith.constant 0 : index
    %c17 = arith.constant 17 : index
    %34 = vector.load %arg1[%c0_20, %c0_21, %c17] : memref<1x4x384xbf16, #tpu.memory_space<vmem>>, vector<1x4x272xbf16>
    %35 = vector.shape_cast %34 : vector<1x4x272xbf16> to vector<4x272xbf16>
    %c12 = arith.constant 12 : index
    %c0_22 = arith.constant 0 : index
    %36 = vector.load %arg16[%c12, %c0_22] : memref<36x272xbf16, #tpu.memory_space<vmem>>, vector<4x272xbf16>
    tpu.vector_store %arg16[%c12, %c0_22], %35 {strides = array<i32>} : memref<36x272xbf16, #tpu.memory_space<vmem>>, vector<4x272xbf16>,
    %c0_23 = arith.constant 0 : index
    %c0_24 = arith.constant 0 : index
    %c18 = arith.constant 18 : index
    %37 = vector.load %arg1[%c0_23, %c0_24, %c18] : memref<1x4x384xbf16, #tpu.memory_space<vmem>>, vector<1x4x272xbf16>
    %38 = vector.shape_cast %37 : vector<1x4x272xbf16> to vector<4x272xbf16>
    %c16 = arith.constant 16 : index
    %c0_25 = arith.constant 0 : index
    %39 = vector.load %arg16[%c16, %c0_25] : memref<36x272xbf16, #tpu.memory_space<vmem>>, vector<4x272xbf16>
    tpu.vector_store %arg16[%c16, %c0_25], %38 {strides = array<i32>} : memref<36x272xbf16, #tpu.memory_space<vmem>>, vector<4x272xbf16>,
    %c0_26 = arith.constant 0 : index
    %c0_27 = arith.constant 0 : index
    %c19 = arith.constant 19 : index
    %40 = vector.load %arg1[%c0_26, %c0_27, %c19] : memref<1x4x384xbf16, #tpu.memory_space<vmem>>, vector<1x4x272xbf16>
    %41 = vector.shape_cast %40 : vector<1x4x272xbf16> to vector<4x272xbf16>
    %c20 = arith.constant 20 : index
    %c0_28 = arith.constant 0 : index
    %42 = vector.load %arg16[%c20, %c0_28] : memref<36x272xbf16, #tpu.memory_space<vmem>>, vector<4x272xbf16>
    tpu.vector_store %arg16[%c20, %c0_28], %41 {strides = array<i32>} : memref<36x272xbf16, #tpu.memory_space<vmem>>, vector<4x272xbf16>,
    %c0_29 = arith.constant 0 : index
    %c0_30 = arith.constant 0 : index
    %c34 = arith.constant 34 : index
    %43 = vector.load %arg1[%c0_29, %c0_30, %c34] : memref<1x4x384xbf16, #tpu.memory_space<vmem>>, vector<1x4x272xbf16>
    %44 = vector.shape_cast %43 : vector<1x4x272xbf16> to vector<4x272xbf16>
    %c24 = arith.constant 24 : index
    %c0_31 = arith.constant 0 : index
    %45 = vector.load %arg16[%c24, %c0_31] : memref<36x272xbf16, #tpu.memory_space<vmem>>, vector<4x272xbf16>
    tpu.vector_store %arg16[%c24, %c0_31], %44 {strides = array<i32>} : memref<36x272xbf16, #tpu.memory_space<vmem>>, vector<4x272xbf16>,
    %c0_32 = arith.constant 0 : index
    %c0_33 = arith.constant 0 : index
    %c35 = arith.constant 35 : index
    %46 = vector.load %arg1[%c0_32, %c0_33, %c35] : memref<1x4x384xbf16, #tpu.memory_space<vmem>>, vector<1x4x272xbf16>
    %47 = vector.shape_cast %46 : vector<1x4x272xbf16> to vector<4x272xbf16>
    %c28 = arith.constant 28 : index
    %c0_34 = arith.constant 0 : index
    %48 = vector.load %arg16[%c28, %c0_34] : memref<36x272xbf16, #tpu.memory_space<vmem>>, vector<4x272xbf16>
    tpu.vector_store %arg16[%c28, %c0_34], %47 {strides = array<i32>} : memref<36x272xbf16, #tpu.memory_space<vmem>>, vector<4x272xbf16>,
    %c0_35 = arith.constant 0 : index
    %c0_36 = arith.constant 0 : index
    %c36 = arith.constant 36 : index
    %49 = vector.load %arg1[%c0_35, %c0_36, %c36] : memref<1x4x384xbf16, #tpu.memory_space<vmem>>, vector<1x4x272xbf16>
    %50 = vector.shape_cast %49 : vector<1x4x272xbf16> to vector<4x272xbf16>
    %c32 = arith.constant 32 : index
    %c0_37 = arith.constant 0 : index
    %51 = vector.load %arg16[%c32, %c0_37] : memref<36x272xbf16, #tpu.memory_space<vmem>>, vector<4x272xbf16>
    tpu.vector_store %arg16[%c32, %c0_37], %50 {strides = array<i32>} : memref<36x272xbf16, #tpu.memory_space<vmem>>, vector<4x272xbf16>,
    %c0_38 = arith.constant 0 : index
    %c0_39 = arith.constant 0 : index
    %52 = vector.load %arg2[%c0_38, %c0_39] : memref<8x36xbf16, #tpu.memory_space<vmem>>, vector<8x36xbf16>
    %c0_40 = arith.constant 0 : index
    %c0_41 = arith.constant 0 : index
    %53 = vector.load %arg16[%c0_40, %c0_41] : memref<36x272xbf16, #tpu.memory_space<vmem>>, vector<36x272xbf16>
    %cst_42 = arith.constant dense<0.000000e+00> : vector<8x272xf32>
    %54 = tpu.matmul %52, %53, %cst_42 {dimension_numbers = #tpu.dot_dimension_numbers<[1], [0], [0], [1], [0, 0, 1, 1], [], []>} : vector<8x36xbf16>, vector<36x272xbf16>, vector<8x272xf32> -> vector<8x272xf32>
    %55 = vector.broadcast %24 : vector<8x1xf32> to vector<8x272xf32>
    %56 = arith.addf %54, %55 : vector<8x272xf32>
    %c0_43 = arith.constant 0 : index
    %c0_44 = arith.constant 0 : index
    %c0_45 = arith.constant 0 : index
    %57 = vector.load %arg5[%c0_43, %c0_44, %c0_45] : memref<1x8x272xf32, #tpu.memory_space<vmem>>, vector<1x8x272xf32>
    %58 = vector.shape_cast %57 : vector<1x8x272xf32> to vector<8x272xf32>
    %c0_46 = arith.constant 0 : index
    %c0_47 = arith.constant 0 : index
    %c0_48 = arith.constant 0 : index
    %59 = vector.load %arg6[%c0_46, %c0_47, %c0_48] : memref<1x8x272xbf16, #tpu.memory_space<vmem>>, vector<1x8x272xbf16>
    %60 = vector.shape_cast %59 : vector<1x8x272xbf16> to vector<8x272xbf16>
    %cst_49 = arith.constant 0.731058597 : f32
    %61 = vector.broadcast %cst_49 : f32 to vector<8x272xf32>
    %62 = arith.mulf %61, %58 : vector<8x272xf32>
    %63 = arith.extf %60 : vector<8x272xbf16> to vector<8x272xf32>
    %cst_50 = arith.constant 1.000000e+00 : f32
    %64 = vector.broadcast %cst_50 : f32 to vector<8x272xf32>
    %65 = arith.subf %64, %63 : vector<8x272xf32>
    %66 = arith.mulf %62, %65 : vector<8x272xf32>
    %67 = arith.addf %66, %56 : vector<8x272xf32>
    %cst_51 = arith.constant 0.000000e+00 : f32
    %68 = vector.broadcast %cst_51 : f32 to vector<8x272xf32>
    %69 = arith.cmpf oge, %67, %68 : vector<8x272xf32>
    %70 = vector.broadcast %18 : vector<1x272xi1> to vector<8x272xi1>
    %71 = arith.andi %69, %70 : vector<8x272xi1>
    %cst_52 = arith.constant 1.000000e+00 : f32
    %cst_53 = arith.constant 0.000000e+00 : f32
    %72 = vector.broadcast %cst_52 : f32 to vector<8x272xf32>
    %73 = vector.broadcast %cst_53 : f32 to vector<8x272xf32>
    %74 = arith.select %71, %72, %73 : vector<8x272xi1>, vector<8x272xf32>
    %75 = arith.truncf %74 : vector<8x272xf32> to vector<8x272xbf16>
    %c0_54 = arith.constant 0 : index
    %c0_55 = arith.constant 0 : index
    %c0_56 = arith.constant 0 : index
    %76 = vector.load %arg10[%c0_54, %c0_55, %c0_56] : memref<1x8x272xf32, #tpu.memory_space<vmem>>, vector<1x8x272xf32>
    %77 = vector.shape_cast %76 : vector<1x8x272xf32> to vector<8x272xf32>
    %78 = vector.shape_cast %67 : vector<8x272xf32> to vector<1x8x272xf32>
    tpu.vector_store %arg10[%c0_54, %c0_55, %c0_56], %78 {strides = array<i32>} : memref<1x8x272xf32, #tpu.memory_space<vmem>>, vector<1x8x272xf32>,
    %c0_57 = arith.constant 0 : index
    %c0_58 = arith.constant 0 : index
    %c0_59 = arith.constant 0 : index
    %79 = vector.load %arg11[%c0_57, %c0_58, %c0_59] : memref<1x8x272xbf16, #tpu.memory_space<vmem>>, vector<1x8x272xbf16>
    %80 = vector.shape_cast %79 : vector<1x8x272xbf16> to vector<8x272xbf16>
    %81 = vector.shape_cast %75 : vector<8x272xbf16> to vector<1x8x272xbf16>
    tpu.vector_store %arg11[%c0_57, %c0_58, %c0_59], %81 {strides = array<i32>} : memref<1x8x272xbf16, #tpu.memory_space<vmem>>, vector<1x8x272xbf16>,
    %c0_60 = arith.constant 0 : index
    %c18_61 = arith.constant 18 : index
    %82 = vector.load %arg15[%c0_60, %c18_61] : memref<8x384xbf16, #tpu.memory_space<vmem>>, vector<8x272xbf16>
    tpu.vector_store %arg15[%c0_60, %c18_61], %75 {strides = array<i32>} : memref<8x384xbf16, #tpu.memory_space<vmem>>, vector<8x272xbf16>,
    %c1_62 = arith.constant 1 : index
    %c0_63 = arith.constant 0 : index
    %c0_64 = arith.constant 0 : index
    %83 = vector.load %arg4[%c1_62, %c0_63, %c0_64] : memref<2x8x1xf32, #tpu.memory_space<vmem>>, vector<1x8x1xf32>
    %84 = vector.shape_cast %83 : vector<1x8x1xf32> to vector<8x1xf32>
    %c0_65 = arith.constant 0 : index
    %c0_66 = arith.constant 0 : index
    %85 = vector.load %arg15[%c0_65, %c0_66] : memref<8x384xbf16, #tpu.memory_space<vmem>>, vector<8x272xbf16>
    %c0_67 = arith.constant 0 : index
    %c0_68 = arith.constant 0 : index
    %86 = vector.load %arg17[%c0_67, %c0_68] : memref<72x272xbf16, #tpu.memory_space<vmem>>, vector<8x272xbf16>
    tpu.vector_store %arg17[%c0_67, %c0_68], %85 {strides = array<i32>} : memref<72x272xbf16, #tpu.memory_space<vmem>>, vector<8x272xbf16>,
    %c0_69 = arith.constant 0 : index
    %c1_70 = arith.constant 1 : index
    %87 = vector.load %arg15[%c0_69, %c1_70] : memref<8x384xbf16, #tpu.memory_space<vmem>>, vector<8x272xbf16>
    %c8_71 = arith.constant 8 : index
    %c0_72 = arith.constant 0 : index
    %88 = vector.load %arg17[%c8_71, %c0_72] : memref<72x272xbf16, #tpu.memory_space<vmem>>, vector<8x272xbf16>
    tpu.vector_store %arg17[%c8_71, %c0_72], %87 {strides = array<i32>} : memref<72x272xbf16, #tpu.memory_space<vmem>>, vector<8x272xbf16>,
    %c0_73 = arith.constant 0 : index
    %c2_74 = arith.constant 2 : index
    %89 = vector.load %arg15[%c0_73, %c2_74] : memref<8x384xbf16, #tpu.memory_space<vmem>>, vector<8x272xbf16>
    %c16_75 = arith.constant 16 : index
    %c0_76 = arith.constant 0 : index
    %90 = vector.load %arg17[%c16_75, %c0_76] : memref<72x272xbf16, #tpu.memory_space<vmem>>, vector<8x272xbf16>
    tpu.vector_store %arg17[%c16_75, %c0_76], %89 {strides = array<i32>} : memref<72x272xbf16, #tpu.memory_space<vmem>>, vector<8x272xbf16>,
    %c0_77 = arith.constant 0 : index
    %c17_78 = arith.constant 17 : index
    %91 = vector.load %arg15[%c0_77, %c17_78] : memref<8x384xbf16, #tpu.memory_space<vmem>>, vector<8x272xbf16>
    %c24_79 = arith.constant 24 : index
    %c0_80 = arith.constant 0 : index
    %92 = vector.load %arg17[%c24_79, %c0_80] : memref<72x272xbf16, #tpu.memory_space<vmem>>, vector<8x272xbf16>
    tpu.vector_store %arg17[%c24_79, %c0_80], %91 {strides = array<i32>} : memref<72x272xbf16, #tpu.memory_space<vmem>>, vector<8x272xbf16>,
    %c0_81 = arith.constant 0 : index
    %c18_82 = arith.constant 18 : index
    %93 = vector.load %arg15[%c0_81, %c18_82] : memref<8x384xbf16, #tpu.memory_space<vmem>>, vector<8x272xbf16>
    %c32_83 = arith.constant 32 : index
    %c0_84 = arith.constant 0 : index
    %94 = vector.load %arg17[%c32_83, %c0_84] : memref<72x272xbf16, #tpu.memory_space<vmem>>, vector<8x272xbf16>
    tpu.vector_store %arg17[%c32_83, %c0_84], %93 {strides = array<i32>} : memref<72x272xbf16, #tpu.memory_space<vmem>>, vector<8x272xbf16>,
    %c0_85 = arith.constant 0 : index
    %c19_86 = arith.constant 19 : index
    %95 = vector.load %arg15[%c0_85, %c19_86] : memref<8x384xbf16, #tpu.memory_space<vmem>>, vector<8x272xbf16>
    %c40 = arith.constant 40 : index
    %c0_87 = arith.constant 0 : index
    %96 = vector.load %arg17[%c40, %c0_87] : memref<72x272xbf16, #tpu.memory_space<vmem>>, vector<8x272xbf16>
    tpu.vector_store %arg17[%c40, %c0_87], %95 {strides = array<i32>} : memref<72x272xbf16, #tpu.memory_space<vmem>>, vector<8x272xbf16>,
    %c0_88 = arith.constant 0 : index
    %c34_89 = arith.constant 34 : index
    %97 = vector.load %arg15[%c0_88, %c34_89] : memref<8x384xbf16, #tpu.memory_space<vmem>>, vector<8x272xbf16>
    %c48 = arith.constant 48 : index
    %c0_90 = arith.constant 0 : index
    %98 = vector.load %arg17[%c48, %c0_90] : memref<72x272xbf16, #tpu.memory_space<vmem>>, vector<8x272xbf16>
    tpu.vector_store %arg17[%c48, %c0_90], %97 {strides = array<i32>} : memref<72x272xbf16, #tpu.memory_space<vmem>>, vector<8x272xbf16>,
    %c0_91 = arith.constant 0 : index
    %c35_92 = arith.constant 35 : index
    %99 = vector.load %arg15[%c0_91, %c35_92] : memref<8x384xbf16, #tpu.memory_space<vmem>>, vector<8x272xbf16>
    %c56 = arith.constant 56 : index
    %c0_93 = arith.constant 0 : index
    %100 = vector.load %arg17[%c56, %c0_93] : memref<72x272xbf16, #tpu.memory_space<vmem>>, vector<8x272xbf16>
    tpu.vector_store %arg17[%c56, %c0_93], %99 {strides = array<i32>} : memref<72x272xbf16, #tpu.memory_space<vmem>>, vector<8x272xbf16>,
    %c0_94 = arith.constant 0 : index
    %c36_95 = arith.constant 36 : index
    %101 = vector.load %arg15[%c0_94, %c36_95] : memref<8x384xbf16, #tpu.memory_space<vmem>>, vector<8x272xbf16>
    %c64 = arith.constant 64 : index
    %c0_96 = arith.constant 0 : index
    %102 = vector.load %arg17[%c64, %c0_96] : memref<72x272xbf16, #tpu.memory_space<vmem>>, vector<8x272xbf16>
    tpu.vector_store %arg17[%c64, %c0_96], %101 {strides = array<i32>} : memref<72x272xbf16, #tpu.memory_space<vmem>>, vector<8x272xbf16>,
    %c0_97 = arith.constant 0 : index
    %c0_98 = arith.constant 0 : index
    %103 = vector.load %arg3[%c0_97, %c0_98] : memref<8x72xbf16, #tpu.memory_space<vmem>>, vector<8x72xbf16>
    %c0_99 = arith.constant 0 : index
    %c0_100 = arith.constant 0 : index
    %104 = vector.load %arg17[%c0_99, %c0_100] : memref<72x272xbf16, #tpu.memory_space<vmem>>, vector<72x272xbf16>
    %cst_101 = arith.constant dense<0.000000e+00> : vector<8x272xf32>
    %105 = tpu.matmul %103, %104, %cst_101 {dimension_numbers = #tpu.dot_dimension_numbers<[1], [0], [0], [1], [0, 0, 1, 1], [], []>} : vector<8x72xbf16>, vector<72x272xbf16>, vector<8x272xf32> -> vector<8x272xf32>
    %106 = vector.broadcast %84 : vector<8x1xf32> to vector<8x272xf32>
    %107 = arith.addf %105, %106 : vector<8x272xf32>
    %c0_102 = arith.constant 0 : index
    %c0_103 = arith.constant 0 : index
    %c0_104 = arith.constant 0 : index
    %108 = vector.load %arg7[%c0_102, %c0_103, %c0_104] : memref<1x8x272xf32, #tpu.memory_space<vmem>>, vector<1x8x272xf32>
    %109 = vector.shape_cast %108 : vector<1x8x272xf32> to vector<8x272xf32>
    %c0_105 = arith.constant 0 : index
    %c0_106 = arith.constant 0 : index
    %c0_107 = arith.constant 0 : index
    %110 = vector.load %arg8[%c0_105, %c0_106, %c0_107] : memref<1x8x272xbf16, #tpu.memory_space<vmem>>, vector<1x8x272xbf16>
    %111 = vector.shape_cast %110 : vector<1x8x272xbf16> to vector<8x272xbf16>
    %cst_108 = arith.constant 0.731058597 : f32
    %112 = vector.broadcast %cst_108 : f32 to vector<8x272xf32>
    %113 = arith.mulf %112, %109 : vector<8x272xf32>
    %114 = arith.extf %111 : vector<8x272xbf16> to vector<8x272xf32>
    %cst_109 = arith.constant 1.000000e+00 : f32
    %115 = vector.broadcast %cst_109 : f32 to vector<8x272xf32>
    %116 = arith.subf %115, %114 : vector<8x272xf32>
    %117 = arith.mulf %113, %116 : vector<8x272xf32>
    %118 = arith.addf %117, %107 : vector<8x272xf32>
    %cst_110 = arith.constant 0.000000e+00 : f32
    %119 = vector.broadcast %cst_110 : f32 to vector<8x272xf32>
    %120 = arith.cmpf oge, %118, %119 : vector<8x272xf32>
    %121 = vector.broadcast %18 : vector<1x272xi1> to vector<8x272xi1>
    %122 = arith.andi %120, %121 : vector<8x272xi1>
    %cst_111 = arith.constant 1.000000e+00 : f32
    %cst_112 = arith.constant 0.000000e+00 : f32
    %123 = vector.broadcast %cst_111 : f32 to vector<8x272xf32>
    %124 = vector.broadcast %cst_112 : f32 to vector<8x272xf32>
    %125 = arith.select %122, %123, %124 : vector<8x272xi1>, vector<8x272xf32>
    %126 = arith.truncf %125 : vector<8x272xf32> to vector<8x272xbf16>
    %c0_113 = arith.constant 0 : index
    %c0_114 = arith.constant 0 : index
    %c0_115 = arith.constant 0 : index
    %127 = vector.load %arg12[%c0_113, %c0_114, %c0_115] : memref<1x8x272xf32, #tpu.memory_space<vmem>>, vector<1x8x272xf32>
    %128 = vector.shape_cast %127 : vector<1x8x272xf32> to vector<8x272xf32>
    %129 = vector.shape_cast %118 : vector<8x272xf32> to vector<1x8x272xf32>
    tpu.vector_store %arg12[%c0_113, %c0_114, %c0_115], %129 {strides = array<i32>} : memref<1x8x272xf32, #tpu.memory_space<vmem>>, vector<1x8x272xf32>,
    %c0_116 = arith.constant 0 : index
    %c0_117 = arith.constant 0 : index
    %c0_118 = arith.constant 0 : index
    %130 = vector.load %arg13[%c0_116, %c0_117, %c0_118] : memref<1x8x272xbf16, #tpu.memory_space<vmem>>, vector<1x8x272xbf16>
    %131 = vector.shape_cast %130 : vector<1x8x272xbf16> to vector<8x272xbf16>
    %132 = vector.shape_cast %126 : vector<8x272xbf16> to vector<1x8x272xbf16>
    tpu.vector_store %arg13[%c0_116, %c0_117, %c0_118], %132 {strides = array<i32>} : memref<1x8x272xbf16, #tpu.memory_space<vmem>>, vector<1x8x272xbf16>,
    %c0_119 = arith.constant 0 : index
    %c0_120 = arith.constant 0 : index
    %133 = vector.load %arg9[%c0_119, %c0_120] : memref<272x64xbf16, #tpu.memory_space<vmem>>, vector<272x64xbf16>
    %cst_121 = arith.constant dense<0.000000e+00> : vector<8x64xf32>
    %134 = tpu.matmul %126, %133, %cst_121 {dimension_numbers = #tpu.dot_dimension_numbers<[1], [0], [0], [1], [0, 0, 1, 1], [], []>} : vector<8x272xbf16>, vector<272x64xbf16>, vector<8x64xf32> -> vector<8x64xf32>
    %cst_122 = arith.constant 5.000000e-01 : f32
    %135 = vector.broadcast %cst_122 : f32 to vector<8x64xf32>
    %136 = arith.cmpf ogt, %134, %135 : vector<8x64xf32>
    %137 = arith.extui %136 : vector<8x64xi1> to vector<8x64xi32>
    %138 = arith.sitofp %137 : vector<8x64xi32> to vector<8x64xf32>
    %139 = arith.truncf %138 : vector<8x64xf32> to vector<8x64xbf16>
    %c0_123 = arith.constant 0 : index
    %c0_124 = arith.constant 0 : index
    %c0_125 = arith.constant 0 : index
    %140 = vector.load %arg14[%c0_123, %c0_124, %c0_125] : memref<1x8x64xbf16, #tpu.memory_space<vmem>>, vector<1x8x64xbf16>
    %141 = vector.shape_cast %140 : vector<1x8x64xbf16> to vector<8x64xbf16>
    %142 = vector.shape_cast %139 : vector<8x64xbf16> to vector<1x8x64xbf16>
    tpu.vector_store %arg14[%c0_123, %c0_124, %c0_125], %142 {strides = array<i32>} : memref<1x8x64xbf16, #tpu.memory_space<vmem>>, vector<1x8x64xbf16>,
    return
  }
  func.func @transform_0(%arg0: i32) -> (i32, i32, i32) {
    %c0_i32 = arith.constant 0 : i32
    %c0_i32_0 = arith.constant 0 : i32
    %c0_i32_1 = arith.constant 0 : i32
    return %arg0, %c0_i32, %c0_i32_0 : i32, i32, i32
  }
  func.func @transform_1(%arg0: i32) -> (i32, i32) {
    %c0_i32 = arith.constant 0 : i32
    %c0_i32_0 = arith.constant 0 : i32
    %c0_i32_1 = arith.constant 0 : i32
    return %c0_i32, %c0_i32_0 : i32, i32
  }
  func.func @transform_2(%arg0: i32) -> (i32, i32) {
    %c0_i32 = arith.constant 0 : i32
    %c0_i32_0 = arith.constant 0 : i32
    %c0_i32_1 = arith.constant 0 : i32
    return %c0_i32, %c0_i32_0 : i32, i32
  }
  func.func @transform_3(%arg0: i32) -> (i32, i32, i32) {
    %c0_i32 = arith.constant 0 : i32
    %c0_i32_0 = arith.constant 0 : i32
    %c0_i32_1 = arith.constant 0 : i32
    %c0_i32_2 = arith.constant 0 : i32
    return %c0_i32, %c0_i32_0, %c0_i32_1 : i32, i32, i32
  }
  func.func @transform_4(%arg0: i32) -> (i32, i32, i32) {
    %c0_i32 = arith.constant 0 : i32
    %c0_i32_0 = arith.constant 0 : i32
    %c0_i32_1 = arith.constant 0 : i32
    return %arg0, %c0_i32, %c0_i32_0 : i32, i32, i32
  }
  func.func @transform_5(%arg0: i32) -> (i32, i32, i32) {
    %c0_i32 = arith.constant 0 : i32
    %c0_i32_0 = arith.constant 0 : i32
    %c0_i32_1 = arith.constant 0 : i32
    return %arg0, %c0_i32, %c0_i32_0 : i32, i32, i32
  }
  func.func @transform_6(%arg0: i32) -> (i32, i32, i32) {
    %c0_i32 = arith.constant 0 : i32
    %c0_i32_0 = arith.constant 0 : i32
    %c0_i32_1 = arith.constant 0 : i32
    return %arg0, %c0_i32, %c0_i32_0 : i32, i32, i32
  }
  func.func @transform_7(%arg0: i32) -> (i32, i32, i32) {
    %c0_i32 = arith.constant 0 : i32
    %c0_i32_0 = arith.constant 0 : i32
    %c0_i32_1 = arith.constant 0 : i32
    return %arg0, %c0_i32, %c0_i32_0 : i32, i32, i32
  }
  func.func @transform_8(%arg0: i32) -> (i32, i32) {
    %c0_i32 = arith.constant 0 : i32
    %c0_i32_0 = arith.constant 0 : i32
    %c0_i32_1 = arith.constant 0 : i32
    return %c0_i32, %c0_i32_0 : i32, i32
  }
  func.func @transform_9(%arg0: i32) -> (i32, i32, i32) {
    %c0_i32 = arith.constant 0 : i32
    %c0_i32_0 = arith.constant 0 : i32
    %c0_i32_1 = arith.constant 0 : i32
    return %arg0, %c0_i32, %c0_i32_0 : i32, i32, i32
  }
  func.func @transform_10(%arg0: i32) -> (i32, i32, i32) {
    %c0_i32 = arith.constant 0 : i32
    %c0_i32_0 = arith.constant 0 : i32
    %c0_i32_1 = arith.constant 0 : i32
    return %arg0, %c0_i32, %c0_i32_0 : i32, i32, i32
  }
  func.func @transform_11(%arg0: i32) -> (i32, i32, i32) {
    %c0_i32 = arith.constant 0 : i32
    %c0_i32_0 = arith.constant 0 : i32
    %c0_i32_1 = arith.constant 0 : i32
    return %arg0, %c0_i32, %c0_i32_0 : i32, i32, i32
  }
  func.func @transform_12(%arg0: i32) -> (i32, i32, i32) {
    %c0_i32 = arith.constant 0 : i32
    %c0_i32_0 = arith.constant 0 : i32
    %c0_i32_1 = arith.constant 0 : i32
    return %arg0, %c0_i32, %c0_i32_0 : i32, i32, i32
  }
  func.func @transform_13(%arg0: i32) -> (i32, i32, i32) {
    %c0_i32 = arith.constant 0 : i32
    %c0_i32_0 = arith.constant 0 : i32
    %c0_i32_1 = arith.constant 0 : i32
    return %arg0, %c0_i32, %c0_i32_0 : i32, i32, i32
  }
}

</mosaic_0001>

<llo_original>
// kernel: ems_block2_forward.1
$region0: #{ems_block2_forward.1}
  #allocation0 [shape = 'u32[]', space=smem, size = 0x4, offset = 0x4, fixed_abs, tag = 'smem constant byte address 0x4 - core index']
  #allocation1 [shape = 'u32[144,128]{1,0:T(1,128)}', space=vmem, size = 0x12000, scoped, tag = 'internal scratch']
  #allocation2 [shape = 'bf16[8,384]{1,0:T(8,128)(2,1)}', space=vmem, size = 0x1800, scoped, tag = 'scratch operand']
  #allocation3 [shape = 'bf16[36,272]{1,0:T(8,128)(2,1)}', space=vmem, size = 0x7800, scoped, tag = 'scratch operand']
  #allocation4 [shape = 'bf16[72,272]{1,0:T(8,128)(2,1)}', space=vmem, size = 0xd800, scoped, tag = 'scratch operand']
  %s0 = inlined_call_operand.vmem [shape: bf16[2,4,384], index: 0, kind: input, shape index: {}]
  %s1 = inlined_call_operand.vmem [shape: bf16[8,36], index: 1, kind: input, shape index: {}]
  %s2 = inlined_call_operand.vmem [shape: bf16[8,72], index: 2, kind: input, shape index: {}]
  %s3 = inlined_call_operand.vmem [shape: f32[2,8,1], index: 3, kind: input, shape index: {}]
  %s4 = inlined_call_operand.vmem [shape: f32[2,8,272], index: 4, kind: input, shape index: {}, may-alias: {4,9}]
  %s5 = inlined_call_operand.vmem [shape: bf16[2,8,272], index: 5, kind: input, shape index: {}, may-alias: {5,10}]
  %s6 = inlined_call_operand.vmem [shape: f32[2,8,272], index: 6, kind: input, shape index: {}, may-alias: {6,11}]
  %s7 = inlined_call_operand.vmem [shape: bf16[2,8,272], index: 7, kind: input, shape index: {}, may-alias: {7,12}]
  %s8 = inlined_call_operand.vmem [shape: bf16[272,64], index: 8, kind: input, shape index: {}]
  %s9 = inlined_call_operand.vmem [shape: f32[2,8,272], index: 9, kind: output, shape index: {0}, may-alias: {4,9}]
  %s10 = inlined_call_operand.vmem [shape: bf16[2,8,272], index: 10, kind: output, shape index: {1}, may-alias: {5,10}]
  %s11 = inlined_call_operand.vmem [shape: f32[2,8,272], index: 11, kind: output, shape index: {2}, may-alias: {6,11}]
  %s12 = inlined_call_operand.vmem [shape: bf16[2,8,272], index: 12, kind: output, shape index: {3}, may-alias: {7,12}]
  %s13 = inlined_call_operand.vmem [shape: bf16[2,8,64], index: 13, kind: output, shape index: {4}]
  %14 = xla_tuple %s9, %s10, %s11, %s12, %s13
  %s15 = sld [smem:[#allocation0]]
  $region101: #{ems_block2_forward.1} parent=0
    _
  %s17 = ssub.s32 1, %s15
  %s18 = scalar_select 0, %s17, %s15
  loop: start=0, step=1, limit=4
  $region2: #{ems_block2_forward.1} parent=0 // loop_pre_header
    _
  $region3: #{ems_block2_forward.1} parent=0 // loop_header
    %s20 = sphi 0, %s24
    %p21 = scmp.ge.s32.totalorder %s20, 4
    %s30 = sphi 0, %s32
    %s33 = sphi 0, %s30
    %s34 = sphi 0, %s33
    %s50 = sphi 0, %s34
    %s54 = sphi 0, %s54
    %s56 = sphi 0, %s54
    %s57 = sphi 0, %s56
    %s71 = sphi 0, %s57
    %s75 = sphi 0, %s75
    %s77 = sphi 0, %s75
    %s78 = sphi 0, %s77
    %s92 = sphi 0, %s78
    %s96 = sphi 0, %s96
    %s98 = sphi 0, %s96
    %s99 = sphi 0, %s98
    %s113 = sphi 0, %s99
    %s119 = sphi 0, %s121
    %s122 = sphi 0, %s119
    %s123 = sphi 0, %s122
    %s139 = sphi 0, %s123
    %s145 = sphi 0, %s147
    %s148 = sphi 0, %s145
    %s149 = sphi 0, %s148
    %s165 = sphi 0, %s149
    %s171 = sphi 0, %s173
    %s174 = sphi 0, %s171
    %s175 = sphi 0, %s174
    %s191 = sphi 0, %s175
    %s197 = sphi 0, %s199
    %s200 = sphi 0, %s197
    %s201 = sphi 0, %s200
    %s217 = sphi 0, %s201
    %s221 = sphi 0, %s221
    %s223 = sphi 0, %s221
    %s224 = sphi 0, %s223
    %s238 = sphi 0, %s224
    %s244 = sphi 0, %s246
    %s247 = sphi 0, %s244
    %s248 = sphi 0, %s247
    %s264 = sphi 0, %s248
    %s270 = sphi 0, %s272
    %s273 = sphi 0, %s270
    %s274 = sphi 0, %s273
    %s290 = sphi 0, %s274
    %s296 = sphi 0, %s298
    %s299 = sphi 0, %s296
    %s300 = sphi 0, %s299
    %s316 = sphi 0, %s300
    %s322 = sphi 0, %s324
    %s325 = sphi 0, %s322
    %s326 = sphi 0, %s325
    %s342 = sphi 0, %s326
    %s348 = sphi 0, %s350
    %s351 = sphi 0, %s348
    %s352 = sphi 0, %s351
    %s368 = sphi 0, %s352
  $region4: #{ems_block2_forward.1} parent=0 // loop_header_branch
    %23 = sbr.rel (%p21) target = $region8
  $region5: #{ems_block2_forward.1} parent=0 // loop_body
    %s25 = ssub.s32 %s20, 1
    %s26 = ssub.s32 %s20, 2
    %s27 = sadd.s32 %s20, 1
    %s28 = ssub.s32 %s20, %s27
    %p29 = scmp.eq.s32.totalorder %s28, 0
    %s31 = sadd.s32 %s30, 1
    %s32 = scalar_select %p29, %s30, %s31
    %p35 = pneg %p29
    %p36 = scmp.eq.s32.totalorder %s20, 1
    %p37 = por %p35, %p36
    %p38 = scmp.ne.s32.totalorder %s30, %s33
    %p39 = scmp.eq.s32.totalorder %s20, 0
    %p40 = por %p38, %p39
    %p41 = scmp.ne.s32.totalorder %s30, %s33
    %p42 = scmp.eq.s32.totalorder %s25, 1
    %p43 = por %p41, %p42
    %p44 = scmp.ne.s32.totalorder %s33, %s34
    %p45 = scmp.eq.s32.totalorder %s25, 0
    %p46 = por %p44, %p45
    %p47 = scmp.ne.s32.totalorder %s33, %s34
    %p48 = scmp.eq.s32.totalorder %s26, 1
    %p49 = por %p47, %p48
    %p51 = scmp.ne.s32.totalorder %s34, %s50
    %p52 = scmp.eq.s32.totalorder %s26, 0
    %p53 = por %p51, %p52
    %s55 = sadd.s32 %s54, 1
    %p58 = scmp.eq.s32.totalorder %s20, 1
    %p59 = scmp.ne.s32.totalorder %s54, %s56
    %p60 = scmp.eq.s32.totalorder %s20, 0
    %p61 = por %p59, %p60
    %p62 = scmp.ne.s32.totalorder %s54, %s56
    %p63 = scmp.eq.s32.totalorder %s25, 1
    %p64 = por %p62, %p63
    %p65 = scmp.ne.s32.totalorder %s56, %s57
    %p66 = scmp.eq.s32.totalorder %s25, 0
    %p67 = por %p65, %p66
    %p68 = scmp.ne.s32.totalorder %s56, %s57
    %p69 = scmp.eq.s32.totalorder %s26, 1
    %p70 = por %p68, %p69
    %p72 = scmp.ne.s32.totalorder %s57, %s71
    %p73 = scmp.eq.s32.totalorder %s26, 0
    %p74 = por %p72, %p73
    %s76 = sadd.s32 %s75, 1
    %p79 = scmp.eq.s32.totalorder %s20, 1
    %p80 = scmp.ne.s32.totalorder %s75, %s77
    %p81 = scmp.eq.s32.totalorder %s20, 0
    %p82 = por %p80, %p81
    %p83 = scmp.ne.s32.totalorder %s75, %s77
    %p84 = scmp.eq.s32.totalorder %s25, 1
    %p85 = por %p83, %p84
    %p86 = scmp.ne.s32.totalorder %s77, %s78
    %p87 = scmp.eq.s32.totalorder %s25, 0
    %p88 = por %p86, %p87
    %p89 = scmp.ne.s32.totalorder %s77, %s78
    %p90 = scmp.eq.s32.totalorder %s26, 1
    %p91 = por %p89, %p90
    %p93 = scmp.ne.s32.totalorder %s78, %s92
    %p94 = scmp.eq.s32.totalorder %s26, 0
    %p95 = por %p93, %p94
    %s97 = sadd.s32 %s96, 1
    %p100 = scmp.eq.s32.totalorder %s20, 1
    %p101 = scmp.ne.s32.totalorder %s96, %s98
    %p102 = scmp.eq.s32.totalorder %s20, 0
    %p103 = por %p101, %p102
    %p104 = scmp.ne.s32.totalorder %s96, %s98
    %p105 = scmp.eq.s32.totalorder %s25, 1
    %p106 = por %p104, %p105
    %p107 = scmp.ne.s32.totalorder %s98, %s99
    %p108 = scmp.eq.s32.totalorder %s25, 0
    %p109 = por %p107, %p108
    %p110 = scmp.ne.s32.totalorder %s98, %s99
    %p111 = scmp.eq.s32.totalorder %s26, 1
    %p112 = por %p110, %p111
    %p114 = scmp.ne.s32.totalorder %s99, %s113
    %p115 = scmp.eq.s32.totalorder %s26, 0
    %p116 = por %p114, %p115
    %s117 = ssub.s32 %s20, %s27
    %p118 = scmp.eq.s32.totalorder %s117, 0
    %s120 = sadd.s32 %s119, 1
    %s121 = scalar_select %p118, %s119, %s120
    %p124 = pneg %p118
    %p125 = scmp.eq.s32.totalorder %s20, 1
    %p126 = por %p124, %p125
    %p127 = scmp.ne.s32.totalorder %s119, %s122
    %p128 = scmp.eq.s32.totalorder %s20, 0
    %p129 = por %p127, %p128
    %p130 = scmp.ne.s32.totalorder %s119, %s122
    %p131 = scmp.eq.s32.totalorder %s25, 1
    %p132 = por %p130, %p131
    %p133 = scmp.ne.s32.totalorder %s122, %s123
    %p134 = scmp.eq.s32.totalorder %s25, 0
    %p135 = por %p133, %p134
    %p136 = scmp.ne.s32.totalorder %s122, %s123
    %p137 = scmp.eq.s32.totalorder %s26, 1
    %p138 = por %p136, %p137
    %p140 = scmp.ne.s32.totalorder %s123, %s139
    %p141 = scmp.eq.s32.totalorder %s26, 0
    %p142 = por %p140, %p141
    %s143 = ssub.s32 %s20, %s27
    %p144 = scmp.eq.s32.totalorder %s143, 0
    %s146 = sadd.s32 %s145, 1
    %s147 = scalar_select %p144, %s145, %s146
    %p150 = pneg %p144
    %p151 = scmp.eq.s32.totalorder %s20, 1
    %p152 = por %p150, %p151
    %p153 = scmp.ne.s32.totalorder %s145, %s148
    %p154 = scmp.eq.s32.totalorder %s20, 0
    %p155 = por %p153, %p154
    %p156 = scmp.ne.s32.totalorder %s145, %s148
    %p157 = scmp.eq.s32.totalorder %s25, 1
    %p158 = por %p156, %p157
    %p159 = scmp.ne.s32.totalorder %s148, %s149
    %p160 = scmp.eq.s32.totalorder %s25, 0
    %p161 = por %p159, %p160
    %p162 = scmp.ne.s32.totalorder %s148, %s149
    %p163 = scmp.eq.s32.totalorder %s26, 1
    %p164 = por %p162, %p163
    %p166 = scmp.ne.s32.totalorder %s149, %s165
    %p167 = scmp.eq.s32.totalorder %s26, 0
    %p168 = por %p166, %p167
    %s169 = ssub.s32 %s20, %s27
    %p170 = scmp.eq.s32.totalorder %s169, 0
    %s172 = sadd.s32 %s171, 1
    %s173 = scalar_select %p170, %s171, %s172
    %p176 = pneg %p170
    %p177 = scmp.eq.s32.totalorder %s20, 1
    %p178 = por %p176, %p177
    %p179 = scmp.ne.s32.totalorder %s171, %s174
    %p180 = scmp.eq.s32.totalorder %s20, 0
    %p181 = por %p179, %p180
    %p182 = scmp.ne.s32.totalorder %s171, %s174
    %p183 = scmp.eq.s32.totalorder %s25, 1
    %p184 = por %p182, %p183
    %p185 = scmp.ne.s32.totalorder %s174, %s175
    %p186 = scmp.eq.s32.totalorder %s25, 0
    %p187 = por %p185, %p186
    %p188 = scmp.ne.s32.totalorder %s174, %s175
    %p189 = scmp.eq.s32.totalorder %s26, 1
    %p190 = por %p188, %p189
    %p192 = scmp.ne.s32.totalorder %s175, %s191
    %p193 = scmp.eq.s32.totalorder %s26, 0
    %p194 = por %p192, %p193
    %s195 = ssub.s32 %s20, %s27
    %p196 = scmp.eq.s32.totalorder %s195, 0
    %s198 = sadd.s32 %s197, 1
    %s199 = scalar_select %p196, %s197, %s198
    %p202 = pneg %p196
    %p203 = scmp.eq.s32.totalorder %s20, 1
    %p204 = por %p202, %p203
    %p205 = scmp.ne.s32.totalorder %s197, %s200
    %p206 = scmp.eq.s32.totalorder %s20, 0
    %p207 = por %p205, %p206
    %p208 = scmp.ne.s32.totalorder %s197, %s200
    %p209 = scmp.eq.s32.totalorder %s25, 1
    %p210 = por %p208, %p209
    %p211 = scmp.ne.s32.totalorder %s200, %s201
    %p212 = scmp.eq.s32.totalorder %s25, 0
    %p213 = por %p211, %p212
    %p214 = scmp.ne.s32.totalorder %s200, %s201
    %p215 = scmp.eq.s32.totalorder %s26, 1
    %p216 = por %p214, %p215
    %p218 = scmp.ne.s32.totalorder %s201, %s217
    %p219 = scmp.eq.s32.totalorder %s26, 0
    %p220 = por %p218, %p219
    %s222 = sadd.s32 %s221, 1
    %p225 = scmp.eq.s32.totalorder %s20, 1
    %p226 = scmp.ne.s32.totalorder %s221, %s223
    %p227 = scmp.eq.s32.totalorder %s20, 0
    %p228 = por %p226, %p227
    %p229 = scmp.ne.s32.totalorder %s221, %s223
    %p230 = scmp.eq.s32.totalorder %s25, 1
    %p231 = por %p229, %p230
    %p232 = scmp.ne.s32.totalorder %s223, %s224
    %p233 = scmp.eq.s32.totalorder %s25, 0
    %p234 = por %p232, %p233
    %p235 = scmp.ne.s32.totalorder %s223, %s224
    %p236 = scmp.eq.s32.totalorder %s26, 1
    %p237 = por %p235, %p236
    %p239 = scmp.ne.s32.totalorder %s224, %s238
    %p240 = scmp.eq.s32.totalorder %s26, 0
    %p241 = por %p239, %p240
    %s242 = ssub.s32 %s20, %s27
    %p243 = scmp.eq.s32.totalorder %s242, 0
    %s245 = sadd.s32 %s244, 1
    %s246 = scalar_select %p243, %s244, %s245
    %p249 = pneg %p243
    %p250 = scmp.eq.s32.totalorder %s20, 1
    %p251 = por %p249, %p250
    %p252 = scmp.ne.s32.totalorder %s244, %s247
    %p253 = scmp.eq.s32.totalorder %s20, 0
    %p254 = por %p252, %p253
    %p255 = scmp.ne.s32.totalorder %s244, %s247
    %p256 = scmp.eq.s32.totalorder %s25, 1
    %p257 = por %p255, %p256
    %p258 = scmp.ne.s32.totalorder %s247, %s248
    %p259 = scmp.eq.s32.totalorder %s25, 0
    %p260 = por %p258, %p259
    %p261 = scmp.ne.s32.totalorder %s247, %s248
    %p262 = scmp.eq.s32.totalorder %s26, 1
    %p263 = por %p261, %p262
    %p265 = scmp.ne.s32.totalorder %s248, %s264
    %p266 = scmp.eq.s32.totalorder %s26, 0
    %p267 = por %p265, %p266
    %s268 = ssub.s32 %s20, %s27
    %p269 = scmp.eq.s32.totalorder %s268, 0
    %s271 = sadd.s32 %s270, 1
    %s272 = scalar_select %p269, %s270, %s271
    %p275 = pneg %p269
    %p276 = scmp.eq.s32.totalorder %s20, 1
    %p277 = por %p275, %p276
    %p278 = scmp.ne.s32.totalorder %s270, %s273
    %p279 = scmp.eq.s32.totalorder %s20, 0
    %p280 = por %p278, %p279
    %p281 = scmp.ne.s32.totalorder %s270, %s273
    %p282 = scmp.eq.s32.totalorder %s25, 1
    %p283 = por %p281, %p282
    %p284 = scmp.ne.s32.totalorder %s273, %s274
    %p285 = scmp.eq.s32.totalorder %s25, 0
    %p286 = por %p284, %p285
    %p287 = scmp.ne.s32.totalorder %s273, %s274
    %p288 = scmp.eq.s32.totalorder %s26, 1
    %p289 = por %p287, %p288
    %p291 = scmp.ne.s32.totalorder %s274, %s290
    %p292 = scmp.eq.s32.totalorder %s26, 0
    %p293 = por %p291, %p292
    %s294 = ssub.s32 %s20, %s27
    %p295 = scmp.eq.s32.totalorder %s294, 0
    %s297 = sadd.s32 %s296, 1
    %s298 = scalar_select %p295, %s296, %s297
    %p301 = pneg %p295
    %p302 = scmp.eq.s32.totalorder %s20, 1
    %p303 = por %p301, %p302
    %p304 = scmp.ne.s32.totalorder %s296, %s299
    %p305 = scmp.eq.s32.totalorder %s20, 0
    %p306 = por %p304, %p305
    %p307 = scmp.ne.s32.totalorder %s296, %s299
    %p308 = scmp.eq.s32.totalorder %s25, 1
    %p309 = por %p307, %p308
    %p310 = scmp.ne.s32.totalorder %s299, %s300
    %p311 = scmp.eq.s32.totalorder %s25, 0
    %p312 = por %p310, %p311
    %p313 = scmp.ne.s32.totalorder %s299, %s300
    %p314 = scmp.eq.s32.totalorder %s26, 1
    %p315 = por %p313, %p314
    %p317 = scmp.ne.s32.totalorder %s300, %s316
    %p318 = scmp.eq.s32.totalorder %s26, 0
    %p319 = por %p317, %p318
    %s320 = ssub.s32 %s20, %s27
    %p321 = scmp.eq.s32.totalorder %s320, 0
    %s323 = sadd.s32 %s322, 1
    %s324 = scalar_select %p321, %s322, %s323
    %p327 = pneg %p321
    %p328 = scmp.eq.s32.totalorder %s20, 1
    %p329 = por %p327, %p328
    %p330 = scmp.ne.s32.totalorder %s322, %s325
    %p331 = scmp.eq.s32.totalorder %s20, 0
    %p332 = por %p330, %p331
    %p333 = scmp.ne.s32.totalorder %s322, %s325
    %p334 = scmp.eq.s32.totalorder %s25, 1
    %p335 = por %p333, %p334
    %p336 = scmp.ne.s32.totalorder %s325, %s326
    %p337 = scmp.eq.s32.totalorder %s25, 0
    %p338 = por %p336, %p337
    %p339 = scmp.ne.s32.totalorder %s325, %s326
    %p340 = scmp.eq.s32.totalorder %s26, 1
    %p341 = por %p339, %p340
    %p343 = scmp.ne.s32.totalorder %s326, %s342
    %p344 = scmp.eq.s32.totalorder %s26, 0
    %p345 = por %p343, %p344
    %s346 = ssub.s32 %s20, %s27
    %p347 = scmp.eq.s32.totalorder %s346, 0
    %s349 = sadd.s32 %s348, 1
    %s350 = scalar_select %p347, %s348, %s349
    %p353 = pneg %p347
    %p354 = scmp.eq.s32.totalorder %s20, 1
    %p355 = por %p353, %p354
    %p356 = scmp.ne.s32.totalorder %s348, %s351
    %p357 = scmp.eq.s32.totalorder %s20, 0
    %p358 = por %p356, %p357
    %p359 = scmp.ne.s32.totalorder %s348, %s351
    %p360 = scmp.eq.s32.totalorder %s25, 1
    %p361 = por %p359, %p360
    %p362 = scmp.ne.s32.totalorder %s351, %s352
    %p363 = scmp.eq.s32.totalorder %s25, 0
    %p364 = por %p362, %p363
    %p365 = scmp.ne.s32.totalorder %s351, %s352
    %p366 = scmp.eq.s32.totalorder %s26, 1
    %p367 = por %p365, %p366
    %p369 = scmp.ne.s32.totalorder %s352, %s368
    %p370 = scmp.eq.s32.totalorder %s26, 0
    %p371 = por %p369, %p370
    %p372 = scmp.le.s32.totalorder 1, %s20
    %p373 = scmp.lt.s32.totalorder %s20, 3
    %p374 = pnand %p372, %p373
    %p375 = pneg %p374
    // Predicated region
    $region9: #{ems_block2_forward.1} parent=5 // pred_check
      _
    $region10: #{ems_block2_forward.1} parent=5 // pred_check_branch
      %377 = sbr.rel (%p374) target = $region12
    $region11: #{ems_block2_forward.1} parent=5 // pred_region
      %s378 = ssub.s32 %s20, 1
      // Predicated region
      $region13: #{ems_block2_forward.1} parent=11 // pred_check
        %p379 = pneg %p67
      $region14: #{ems_block2_forward.1} parent=11 // pred_check_branch
        %381 = sbr.rel (%p379) target = $region16
      $region15: #{ems_block2_forward.1} parent=11 // pred_region
        _
      $region16: #{ems_block2_forward.1} parent=11 // pred_fallthru
        _
      // Predicated region
      $region17: #{ems_block2_forward.1} parent=11 // pred_check
        %p382 = pneg %p88
      $region18: #{ems_block2_forward.1} parent=11 // pred_check_branch
        %384 = sbr.rel (%p382) target = $region20
      $region19: #{ems_block2_forward.1} parent=11 // pred_region
        _
      $region20: #{ems_block2_forward.1} parent=11 // pred_fallthru
        _
      // Predicated region
      $region21: #{ems_block2_forward.1} parent=11 // pred_check
        %p385 = pneg %p109
      $region22: #{ems_block2_forward.1} parent=11 // pred_check_branch
        %387 = sbr.rel (%p385) target = $region24
      $region23: #{ems_block2_forward.1} parent=11 // pred_region
        _
      $region24: #{ems_block2_forward.1} parent=11 // pred_fallthru
        _
      // Predicated region
      $region25: #{ems_block2_forward.1} parent=11 // pred_check
        %p388 = pneg %p234
      $region26: #{ems_block2_forward.1} parent=11 // pred_check_branch
        %390 = sbr.rel (%p388) target = $region28
      $region27: #{ems_block2_forward.1} parent=11 // pred_region
        _
      $region28: #{ems_block2_forward.1} parent=11 // pred_fallthru
        _
    $region12: #{ems_block2_forward.1} parent=5 // pred_fallthru
      _
    %p391 = scmp.lt.s32.totalorder %s20, 2
    // Predicated region
    $region29: #{ems_block2_forward.1} parent=5 // pred_check
      %p392 = pneg %p391
    $region30: #{ems_block2_forward.1} parent=5 // pred_check_branch
      %394 = sbr.rel (%p392) target = $region32
    $region31: #{ems_block2_forward.1} parent=5 // pred_region
      // Predicated region
      $region33: #{ems_block2_forward.1} parent=31 // pred_check
        %p395 = pneg %p40
      $region34: #{ems_block2_forward.1} parent=31 // pred_check_branch
        %397 = sbr.rel (%p395) target = $region36
      $region35: #{ems_block2_forward.1} parent=31 // pred_region
        %p398 = scmp.lt.s32.totalorder %s20, 1
        %s399 = scalar_select %p398, %s20, 1
        %s400 = smul.addr %s399, 3
        %s401 = smul.addr %s400, 2
        %s402 = scalar_lea.vmem %s0, %s401
      $region36: #{ems_block2_forward.1} parent=31 // pred_fallthru
        _
      // Predicated region
      $region37: #{ems_block2_forward.1} parent=31 // pred_check
        %p403 = pneg %p129
      $region38: #{ems_block2_forward.1} parent=31 // pred_check_branch
        %405 = sbr.rel (%p403) target = $region40
      $region39: #{ems_block2_forward.1} parent=31 // pred_region
        %p406 = scmp.lt.s32.totalorder %s20, 1
        %s407 = scalar_select %p406, %s20, 1
        %s408 = smul.addr %s407, 3
        %s409 = smul.addr %s408, 8
        %s410 = scalar_lea.vmem %s4, %s409
      $region40: #{ems_block2_forward.1} parent=31 // pred_fallthru
        _
      // Predicated region
      $region41: #{ems_block2_forward.1} parent=31 // pred_check
        %p411 = pneg %p155
      $region42: #{ems_block2_forward.1} parent=31 // pred_check_branch
        %413 = sbr.rel (%p411) target = $region44
      $region43: #{ems_block2_forward.1} parent=31 // pred_region
        %p414 = scmp.lt.s32.totalorder %s20, 1
        %s415 = scalar_select %p414, %s20, 1
        %s416 = smul.addr %s415, 3
        %s417 = smul.addr %s416, 4
        %s418 = scalar_lea.vmem %s5, %s417
      $region44: #{ems_block2_forward.1} parent=31 // pred_fallthru
        _
      // Predicated region
      $region45: #{ems_block2_forward.1} parent=31 // pred_check
        %p419 = pneg %p181
      $region46: #{ems_block2_forward.1} parent=31 // pred_check_branch
        %421 = sbr.rel (%p419) target = $region48
      $region47: #{ems_block2_forward.1} parent=31 // pred_region
        %p422 = scmp.lt.s32.totalorder %s20, 1
        %s423 = scalar_select %p422, %s20, 1
        %s424 = smul.addr %s423, 3
        %s425 = smul.addr %s424, 8
        %s426 = scalar_lea.vmem %s6, %s425
      $region48: #{ems_block2_forward.1} parent=31 // pred_fallthru
        _
      // Predicated region
      $region49: #{ems_block2_forward.1} parent=31 // pred_check
        %p427 = pneg %p207
      $region50: #{ems_block2_forward.1} parent=31 // pred_check_branch
        %429 = sbr.rel (%p427) target = $region52
      $region51: #{ems_block2_forward.1} parent=31 // pred_region
        %p430 = scmp.lt.s32.totalorder %s20, 1
        %s431 = scalar_select %p430, %s20, 1
        %s432 = smul.addr %s431, 3
        %s433 = smul.addr %s432, 4
        %s434 = scalar_lea.vmem %s7, %s433
      $region52: #{ems_block2_forward.1} parent=31 // pred_fallthru
        _
    $region32: #{ems_block2_forward.1} parent=5 // pred_fallthru
      _
    %p435 = scmp.le.s32.totalorder 1, %s20
    %p436 = scmp.lt.s32.totalorder %s20, 3
    %p437 = pnand %p435, %p436
    %p438 = pneg %p437
    // Predicated region
    $region53: #{ems_block2_forward.1} parent=5 // pred_check
      _
    $region54: #{ems_block2_forward.1} parent=5 // pred_check_branch
      %440 = sbr.rel (%p437) target = $region56
    $region55: #{ems_block2_forward.1} parent=5 // pred_region
      %s441 = ssub.s32 %s20, 1
      %p442 = scmp.lt.s32.totalorder %s25, 1
      %s443 = scalar_select %p442, %s25, 1
      %s444 = smul.addr %s443, 3
      %s445 = smul.addr %s444, 2
      %s446 = scalar_lea.vmem %s0, %s445
      %p447 = pneg %p46
      %p448 = pneg %p43
      %p449 = pneg %p67
      %p450 = pneg %p64
      %p451 = pneg %p88
      %p452 = pneg %p85
      %p453 = pneg %p109
      %p454 = pneg %p106
      %p455 = scmp.lt.s32.totalorder %s25, 1
      %s456 = scalar_select %p455, %s25, 1
      %s457 = smul.addr %s456, 3
      %s458 = smul.addr %s457, 8
      %s459 = scalar_lea.vmem %s4, %s458
      %p460 = pneg %p135
      %p461 = pneg %p132
      %p462 = scmp.lt.s32.totalorder %s25, 1
      %s463 = scalar_select %p462, %s25, 1
      %s464 = smul.addr %s463, 3
      %s465 = smul.addr %s464, 4
      %s466 = scalar_lea.vmem %s5, %s465
      %p467 = pneg %p161
      %p468 = pneg %p158
      %p469 = scmp.lt.s32.totalorder %s25, 1
      %s470 = scalar_select %p469, %s25, 1
      %s471 = smul.addr %s470, 3
      %s472 = smul.addr %s471, 8
      %s473 = scalar_lea.vmem %s6, %s472
      %p474 = pneg %p187
      %p475 = pneg %p184
      %p476 = scmp.lt.s32.totalorder %s25, 1
      %s477 = scalar_select %p476, %s25, 1
      %s478 = smul.addr %s477, 3
      %s479 = smul.addr %s478, 4
      %s480 = scalar_lea.vmem %s7, %s479
      %p481 = pneg %p213
      %p482 = pneg %p210
      %p483 = pneg %p234
      %p484 = pneg %p231
      %p485 = pneg %p260
      %p486 = pneg %p257
      %p487 = scmp.lt.s32.totalorder %s25, 1
      %s488 = scalar_select %p487, %s25, 1
      %s489 = smul.addr %s488, 3
      %s490 = smul.addr %s489, 8
      %s491 = scalar_lea.vmem %s9, %s490
      %p492 = pneg %p286
      %p493 = pneg %p283
      %p494 = scmp.lt.s32.totalorder %s25, 1
      %s495 = scalar_select %p494, %s25, 1
      %s496 = smul.addr %s495, 3
      %s497 = smul.addr %s496, 4
      %s498 = scalar_lea.vmem %s10, %s497
      %p499 = pneg %p312
      %p500 = pneg %p309
      %p501 = scmp.lt.s32.totalorder %s25, 1
      %s502 = scalar_select %p501, %s25, 1
      %s503 = smul.addr %s502, 3
      %s504 = smul.addr %s503, 8
      %s505 = scalar_lea.vmem %s11, %s504
      %p506 = pneg %p338
      %p507 = pneg %p335
      %p508 = scmp.lt.s32.totalorder %s25, 1
      %s509 = scalar_select %p508, %s25, 1
      %s510 = smul.addr %s509, 3
      %s511 = smul.addr %s510, 4
      %s512 = scalar_lea.vmem %s12, %s511
      %p513 = pneg %p364
      %p514 = pneg %p361
      %p515 = scmp.lt.s32.totalorder %s25, 1
      %s516 = scalar_select %p515, %s25, 1
      %s517 = smul.addr %s516, 4
      %s518 = scalar_lea.vmem %s13, %s517
      %p519 = scmp.lt.s32.totalorder %s25, 1
      %s520 = scalar_select %p519, %s25, 1
      %s521 = smul.addr %s520, 3
      %s522 = smul.addr %s521, 2
      %s523 = scalar_lea.vmem %s0, %s522
      %p524 = scmp.lt.s32.totalorder %s25, 1
      %s525 = scalar_select %p524, %s25, 1
      %s526 = smul.addr %s525, 3
      %s527 = smul.addr %s526, 8
      %s528 = scalar_lea.vmem %s4, %s527
      %p529 = scmp.lt.s32.totalorder %s25, 1
      %s530 = scalar_select %p529, %s25, 1
      %s531 = smul.addr %s530, 3
      %s532 = smul.addr %s531, 4
      %s533 = scalar_lea.vmem %s5, %s532
      %p534 = scmp.lt.s32.totalorder %s25, 1
      %s535 = scalar_select %p534, %s25, 1
      %s536 = smul.addr %s535, 3
      %s537 = smul.addr %s536, 8
      %s538 = scalar_lea.vmem %s6, %s537
      %p539 = scmp.lt.s32.totalorder %s25, 1
      %s540 = scalar_select %p539, %s25, 1
      %s541 = smul.addr %s540, 3
      %s542 = smul.addr %s541, 4
      %s543 = scalar_lea.vmem %s7, %s542
      %p544 = scmp.lt.s32.totalorder %s25, 1
      %s545 = scalar_select %p544, %s25, 1
      %s546 = smul.addr %s545, 3
      %s547 = smul.addr %s546, 8
      %s548 = scalar_lea.vmem %s9, %s547
      %p549 = scmp.lt.s32.totalorder %s25, 1
      %s550 = scalar_select %p549, %s25, 1
      %s551 = smul.addr %s550, 3
      %s552 = smul.addr %s551, 4
      %s553 = scalar_lea.vmem %s10, %s552
      %p554 = scmp.lt.s32.totalorder %s25, 1
      %s555 = scalar_select %p554, %s25, 1
      %s556 = smul.addr %s555, 3
      %s557 = smul.addr %s556, 8
      %s558 = scalar_lea.vmem %s11, %s557
      %p559 = scmp.lt.s32.totalorder %s25, 1
      %s560 = scalar_select %p559, %s25, 1
      %s561 = smul.addr %s560, 3
      %s562 = smul.addr %s561, 4
      %s563 = scalar_lea.vmem %s12, %s562
      %p564 = scmp.lt.s32.totalorder %s25, 1
      %s565 = scalar_select %p564, %s25, 1
      %s566 = smul.addr %s565, 4
      %s567 = scalar_lea.vmem %s13, %s566
      %v569 = vlaneseq
      %v570 = vand.u32 %v569, 127
      %v571 = vadd.s32 %v570, 128
      %v572 = vadd.s32 %v570, 256
      %vm573 = vcmp.lt.s32.totalorder %v570, 0
      %v574 = vsub.s32 0, %v570
      %v575 = vsel %vm573, %v574, %v570
      %v576 = vmul.u32.u64.compose %v575, 4042322161
      %v577 = vextract.low.u32 %v576
      %v578 = vextract.high.u32 %v576
      %v579 = vshrl.u32 %v578, 4
      %v580 = vmul.u32 %v579, 17
      %v581 = vsub.s32 %v575, %v580
      %v582 = vsub.s32 0, %v581
      %v583 = vsel %vm573, %v582, %v581
      %vm584 = vcmp.lt.s32.totalorder %v571, 0
      %v585 = vsub.s32 0, %v571
      %v586 = vsel %vm584, %v585, %v571
      %v587 = vmul.u32.u64.compose %v586, 4042322161
      %v588 = vextract.low.u32 %v587
      %v589 = vextract.high.u32 %v587
      %v590 = vshrl.u32 %v589, 4
      %v591 = vmul.u32 %v590, 17
      %v592 = vsub.s32 %v586, %v591
      %v593 = vsub.s32 0, %v592
      %v594 = vsel %vm584, %v593, %v592
      %vm595 = vcmp.lt.s32.totalorder %v572, 0
      %v596 = vsub.s32 0, %v572
      %v597 = vsel %vm595, %v596, %v572
      %v598 = vmul.u32.u64.compose %v597, 4042322161
      %v599 = vextract.low.u32 %v598
      %v600 = vextract.high.u32 %v598
      %v601 = vshrl.u32 %v600, 4
      %v602 = vmul.u32 %v601, 17
      %v603 = vsub.s32 %v597, %v602
      %v604 = vsub.s32 0, %v603
      %v605 = vsel %vm595, %v604, %v603
      %vm606 = vcmp.ne.s32.totalorder %v583, 0
      %vm607 = vcmp.ne.s32.totalorder %v594, 0
      %vm608 = vcmp.ne.s32.totalorder %v605, 0
      %vm609 = vcmp.lt.s32.totalorder %v583, 0
      %vm610 = vcmp.lt.s32.totalorder %v594, 0
      %vm611 = vcmp.lt.s32.totalorder %v605, 0
      %vm612 = vmand %vm609, %vm606
      %vm613 = vmand %vm610, %vm607
      %vm614 = vmand %vm611, %vm608
      %v615 = vadd.s32 %v583, 17
      %v616 = vadd.s32 %v594, 17
      %v617 = vadd.s32 %v605, 17
      %v618 = vsel %vm612, %v615, %v583
      %v619 = vsel %vm613, %v616, %v594
      %v620 = vsel %vm614, %v617, %v605
      %vm621 = vcmp.ne.s32.totalorder %v618, 16
      %vm622 = vcmp.ne.s32.totalorder %v619, 16
      %vm623 = vcmp.ne.s32.totalorder %v620, 16
      %vm624 = vcmask 142336
      %625 = vst.msk [vmem:[#allocation2] sm:$0xf] %vm624, 0
      %vm626 = vcmask 1043728
      %627 = vst.msk [vmem:[#allocation2 + $0x8] sm:$0xf] %vm626, 0
      %v628 = vld [vmem:[%s3] sm:$0xff]
      %v629 = vld [vmem:[%s523] sm:$0x3f]
      %v631 = vcombine.high %v629, %v629
      %v633 = vunpack.c.l.s4 1983009808
      %v634 = vunpack.c.0.s8 %v633
      %v635 = vlaneseq
      %v636 = vshrl.u32 %v635, 7
      %v637 = vsub.s32 %v634, %v636
      %v638 = vrot.slane %v629, %v637
      %v640 = vunpack.c.l.s4 1983009808
      %v641 = vunpack.c.0.s8 %v640
      %v642 = vlaneseq
      %v643 = vshrl.u32 %v642, 7
      %v644 = vsub.s32 %v641, %v643
      %v645 = vrot.slane %v631, %v644
      %648 = vst [vmem:[#allocation3] sm:$0x33] %v638
      %vm649 = vcmask 123904
      %650 = vst.msk [vmem:[#allocation3 + $0x8] sm:$0x3] %vm649, %v645
      %v651 = vld [vmem:[%s523] sm:$0x3f]
      %v653 = vcombine.low %v651, %v651
      %v655 = vunpack.c.l.s4 1983009808
      %v656 = vunpack.c.0.s8 %v655
      %v657 = vlaneseq
      %v658 = vshrl.u32 %v657, 7
      %v659 = vsub.s32 %v656, %v658
      %v660 = vrot.slane %v653, %v659
      %v662 = vunpack.c.l.s4 1983009808
      %v663 = vunpack.c.0.s8 %v662
      %v664 = vlaneseq
      %v665 = vshrl.u32 %v664, 7
      %v666 = vsub.s32 %v663, %v665
      %v667 = vrot.slane %v651, %v666
      %668 = vrot.lane.b32.xlu0 %v660, 127
      %v669 = vpop.permute.xlu0 %668
      %670 = vrot.lane.b32.xlu0 %v667, 127
      %v671 = vpop.permute.xlu0 %670
      %v672 = vrot.slane %v669, 4
      %v673 = vrot.slane %v671, 4
      %vm674 = vcmask 1043456
      %v675 = vsel %vm674, %v672, %v673
      %vm676 = vcmask 1039360
      %v677 = vsel %vm676, %v669, %v675
      %680 = vst [vmem:[#allocation3] sm:$0xcc] %v677
      %vm681 = vcmask 125954
      %682 = vst.msk [vmem:[#allocation3 + $0x8] sm:$0xc] %vm681, %v671
      %v683 = vld [vmem:[%s523] sm:$0x3f]
      %v685 = vcombine.high %v683, %v683
      %v687 = vunpack.c.l.s4 1983009808
      %v688 = vunpack.c.0.s8 %v687
      %v689 = vlaneseq
      %v690 = vshrl.u32 %v689, 7
      %v691 = vsub.s32 %v688, %v690
      %v692 = vrot.slane %v683, %v691
      %v694 = vunpack.c.l.s4 1983009808
      %v695 = vunpack.c.0.s8 %v694
      %v696 = vlaneseq
      %v697 = vshrl.u32 %v696, 7
      %v698 = vsub.s32 %v695, %v697
      %v699 = vrot.slane %v685, %v698
      %700 = vrot.lane.b32.xlu0 %v692, 126
      %v701 = vpop.permute.xlu0 %700
      %702 = vrot.lane.b32.xlu0 %v699, 126
      %v703 = vpop.permute.xlu0 %702
      %v704 = vrot.slane %v701, 4
      %v705 = vrot.slane %v703, 4
      %v706 = vsel %vm674, %v704, %v705
      %vm707 = vcmask 1031168
      %v708 = vsel %vm707, %v701, %v706
      %711 = vst [vmem:[#allocation3 + $0xc] sm:$0x33] %v708
      %712 = vst.msk [vmem:[#allocation3 + $0x14] sm:$0x3] %vm649, %v703
      %v713 = vld [vmem:[%s523] sm:$0x3f]
      %v715 = vcombine.low %v713, %v713
      %v717 = vunpack.c.l.s4 1983009808
      %v718 = vunpack.c.0.s8 %v717
      %v719 = vlaneseq
      %v720 = vshrl.u32 %v719, 7
      %v721 = vsub.s32 %v718, %v720
      %v722 = vrot.slane %v715, %v721
      %v724 = vunpack.c.l.s4 1983009808
      %v725 = vunpack.c.0.s8 %v724
      %v726 = vlaneseq
      %v727 = vshrl.u32 %v726, 7
      %v728 = vsub.s32 %v725, %v727
      %v729 = vrot.slane %v713, %v728
      %730 = vrot.lane.b32.xlu0 %v722, 111
      %v731 = vpop.permute.xlu0 %730
      %732 = vrot.lane.b32.xlu0 %v729, 111
      %v733 = vpop.permute.xlu0 %732
      %v734 = vrot.slane %v731, 4
      %v735 = vrot.slane %v733, 4
      %v736 = vsel %vm674, %v734, %v735
      %vm737 = vcmask 908288
      %v738 = vsel %vm737, %v731, %v736
      %741 = vst [vmem:[#allocation3 + $0xc] sm:$0xcc] %v738
      %742 = vst.msk [vmem:[#allocation3 + $0x14] sm:$0xc] %vm681, %v733
      %v743 = vld [vmem:[%s523] sm:$0x3f]
      %v745 = vcombine.high %v743, %v743
      %v747 = vunpack.c.l.s4 1983009808
      %v748 = vunpack.c.0.s8 %v747
      %v749 = vlaneseq
      %v750 = vshrl.u32 %v749, 7
      %v751 = vsub.s32 %v748, %v750
      %v752 = vrot.slane %v743, %v751
      %v754 = vunpack.c.l.s4 1983009808
      %v755 = vunpack.c.0.s8 %v754
      %v756 = vlaneseq
      %v757 = vshrl.u32 %v756, 7
      %v758 = vsub.s32 %v755, %v757
      %v759 = vrot.slane %v745, %v758
      %760 = vrot.lane.b32.xlu0 %v752, 110
      %v761 = vpop.permute.xlu0 %760
      %762 = vrot.lane.b32.xlu0 %v759, 110
      %v763 = vpop.permute.xlu0 %762
      %v764 = vrot.slane %v761, 4
      %v765 = vrot.slane %v763, 4
      %v766 = vsel %vm674, %v764, %v765
      %vm767 = vcmask 900096
      %v768 = vsel %vm767, %v761, %v766
      %771 = vst [vmem:[#allocation3 + $0x18] sm:$0x33] %v768
      %772 = vst.msk [vmem:[#allocation3 + $0x20] sm:$0x3] %vm649, %v763
      %v773 = vld [vmem:[%s523] sm:$0x3f]
      %v775 = vcombine.low %v773, %v773
      %v777 = vunpack.c.l.s4 1983009808
      %v778 = vunpack.c.0.s8 %v777
      %v779 = vlaneseq
      %v780 = vshrl.u32 %v779, 7
      %v781 = vsub.s32 %v778, %v780
      %v782 = vrot.slane %v775, %v781
      %v784 = vunpack.c.l.s4 1983009808
      %v785 = vunpack.c.0.s8 %v784
      %v786 = vlaneseq
      %v787 = vshrl.u32 %v786, 7
      %v788 = vsub.s32 %v785, %v787
      %v789 = vrot.slane %v773, %v788
      %790 = vrot.lane.b32.xlu0 %v782, 109
      %v791 = vpop.permute.xlu0 %790
      %792 = vrot.lane.b32.xlu0 %v789, 109
      %v793 = vpop.permute.xlu0 %792
      %v794 = vrot.slane %v791, 4
      %v795 = vrot.slane %v793, 4
      %v796 = vsel %vm674, %v794, %v795
      %vm797 = vcmask 891904
      %v798 = vsel %vm797, %v791, %v796
      %801 = vst [vmem:[#allocation3 + $0x18] sm:$0xcc] %v798
      %802 = vst.msk [vmem:[#allocation3 + $0x20] sm:$0xc] %vm681, %v793
      %v803 = vld [vmem:[%s523] sm:$0x3f]
      %v805 = vcombine.high %v803, %v803
      %v807 = vunpack.c.l.s4 1983009808
      %v808 = vunpack.c.0.s8 %v807
      %v809 = vlaneseq
      %v810 = vshrl.u32 %v809, 7
      %v811 = vsub.s32 %v808, %v810
      %v812 = vrot.slane %v803, %v811
      %v814 = vunpack.c.l.s4 1983009808
      %v815 = vunpack.c.0.s8 %v814
      %v816 = vlaneseq
      %v817 = vshrl.u32 %v816, 7
      %v818 = vsub.s32 %v815, %v817
      %v819 = vrot.slane %v805, %v818
      %820 = vrot.lane.b32.xlu0 %v812, 94
      %v821 = vpop.permute.xlu0 %820
      %822 = vrot.lane.b32.xlu0 %v819, 94
      %v823 = vpop.permute.xlu0 %822
      %v824 = vrot.slane %v821, 4
      %v825 = vrot.slane %v823, 4
      %v826 = vsel %vm674, %v824, %v825
      %vm827 = vcmask 769024
      %v828 = vsel %vm827, %v821, %v826
      %831 = vst [vmem:[#allocation3 + $0x24] sm:$0x33] %v828
      %832 = vst.msk [vmem:[#allocation3 + $0x2c] sm:$0x3] %vm649, %v823
      %v833 = vld [vmem:[%s523] sm:$0x3f]
      %v835 = vcombine.low %v833, %v833
      %v837 = vunpack.c.l.s4 1983009808
      %v838 = vunpack.c.0.s8 %v837
      %v839 = vlaneseq
      %v840 = vshrl.u32 %v839, 7
      %v841 = vsub.s32 %v838, %v840
      %v842 = vrot.slane %v835, %v841
      %v844 = vunpack.c.l.s4 1983009808
      %v845 = vunpack.c.0.s8 %v844
      %v846 = vlaneseq
      %v847 = vshrl.u32 %v846, 7
      %v848 = vsub.s32 %v845, %v847
      %v849 = vrot.slane %v833, %v848
      %850 = vrot.lane.b32.xlu0 %v842, 93
      %v851 = vpop.permute.xlu0 %850
      %852 = vrot.lane.b32.xlu0 %v849, 93
      %v853 = vpop.permute.xlu0 %852
      %v854 = vrot.slane %v851, 4
      %v855 = vrot.slane %v853, 4
      %v856 = vsel %vm674, %v854, %v855
      %vm857 = vcmask 760832
      %v858 = vsel %vm857, %v851, %v856
      %861 = vst [vmem:[#allocation3 + $0x24] sm:$0xcc] %v858
      %862 = vst.msk [vmem:[#allocation3 + $0x2c] sm:$0xc] %vm681, %v853
      %v863 = vld [vmem:[%s523] sm:$0x3f]
      %v865 = vcombine.high %v863, %v863
      %v867 = vunpack.c.l.s4 1983009808
      %v868 = vunpack.c.0.s8 %v867
      %v869 = vlaneseq
      %v870 = vshrl.u32 %v869, 7
      %v871 = vsub.s32 %v868, %v870
      %v872 = vrot.slane %v863, %v871
      %v874 = vunpack.c.l.s4 1983009808
      %v875 = vunpack.c.0.s8 %v874
      %v876 = vlaneseq
      %v877 = vshrl.u32 %v876, 7
      %v878 = vsub.s32 %v875, %v877
      %v879 = vrot.slane %v865, %v878
      %880 = vrot.lane.b32.xlu0 %v872, 92
      %v881 = vpop.permute.xlu0 %880
      %882 = vrot.lane.b32.xlu0 %v879, 92
      %v883 = vpop.permute.xlu0 %882
      %v884 = vrot.slane %v881, 4
      %v885 = vrot.slane %v883, 4
      %v886 = vsel %vm674, %v884, %v885
      %vm887 = vcmask 752640
      %v888 = vsel %vm887, %v881, %v886
      %891 = vst [vmem:[#allocation3 + $0x30] sm:$0x33] %v888
      %892 = vst.msk [vmem:[#allocation3 + $0x38] sm:$0x3] %vm649, %v883
      %v893 = vld [vmem:[%s1] sm:$0xf]
      %v894 = vld [vmem:[#allocation3] sm:$0xff]
      %v895 = vld [vmem:[#allocation3 + $0x8] sm:$0xf]
      %v896 = vld [vmem:[#allocation3 + $0xc] sm:$0xff]
      %v897 = vld [vmem:[#allocation3 + $0x14] sm:$0xf]
      %v898 = vld [vmem:[#allocation3 + $0x18] sm:$0xff]
      %v899 = vld [vmem:[#allocation3 + $0x20] sm:$0xf]
      %v900 = vld [vmem:[#allocation3 + $0x24] sm:$0xff]
      %v901 = vld [vmem:[#allocation3 + $0x2c] sm:$0xf]
      %v902 = vld [vmem:[#allocation3 + $0x30] sm:$0x33]
      %v903 = vld [vmem:[#allocation3 + $0x38] sm:$0x3]
      %905 = vset.pattern.permute.xlu0 0
      %906 = vperm.xlu0 %905, %v628
      %v907 = vpop.permute.xlu0 %906
      %v919 = vunpack.c.l.b16 %v894
      %v920 = vunpack.c.h.b16 %v894
      %v921 = vunpack.c.l.b16 %v895
      %v922 = vunpack.c.l.b16 %v896
      %v923 = vunpack.c.h.b16 %v896
      %v924 = vunpack.c.l.b16 %v897
      %v925 = vunpack.c.l.b16 %v898
      %v926 = vunpack.c.h.b16 %v898
      %v927 = vunpack.c.l.b16 %v899
      %v928 = vunpack.c.l.b16 %v900
      %v929 = vunpack.c.h.b16 %v900
      %v930 = vunpack.c.l.b16 %v901
      %v931 = vunpack.c.l.b16 %v902
      %v932 = vunpack.c.h.b16 %v902
      %v933 = vunpack.c.l.b16 %v903
      %v934 = vpack.c.b16 %v922, %v919
      %v935 = vpack.c.b16 %v923, %v920
      %v936 = vpack.c.b16 %v924, %v921
      %v937 = vpack.c.b16 %v928, %v925
      %v938 = vpack.c.b16 %v929, %v926
      %v939 = vpack.c.b16 %v930, %v927
      %v940 = vpack.c.b16 %v931, %v931
      %v941 = vpack.c.b16 %v932, %v932
      %v942 = vpack.c.b16 %v933, %v933
      %vm949 = vcmask 293888
      %v951 = vsel %vm949, %v893, 0
      %vm953 = vcmask 1041408
      %v955 = vsel %vm953, %v940, 0
      %v958 = vsel %vm953, %v941, 0
      %v961 = vsel %vm953, %v942, 0
      %963 = vmatprep.subr.bf16.mxu0 %v935
      %964 = vmatpush1.bf16.msra.mxu0 %v934
      %965 = vmatprep.subr.bf16.mxu0 %v938
      %966 = vmatpush1.bf16.msra.mxu0 %v937
      %967 = vmatprep.subr.bf16.mxu0 %v958
      %968 = vmatpush1.bf16.msra.mxu0 %v955
      %969 = vmatprep.subr.bf16.mxu0 0
      %970 = vmatpush1.bf16.msra.mxu0 0
      %971 = vmatprep.subr.bf16.mxu0 0
      %972 = vmatpush1.bf16.msra.mxu0 0
      %973 = vmatprep.subr.bf16.mxu0 0
      %974 = vmatpush1.bf16.msra.mxu0 0
      %975 = vmatprep.subr.bf16.mxu0 0
      %976 = vmatpush1.bf16.msra.mxu0 0
      %977 = vmatprep.subr.bf16.mxu0 0
      %978 = vmatpush1.bf16.msra.mxu0 0
      %979 = vmatprep.subr.bf16.mxu0 0
      %980 = vmatpush1.bf16.msra.mxu0 0
      %981 = vmatprep.subr.bf16.mxu0 0
      %982 = vmatpush1.bf16.msra.mxu0 0
      %983 = vmatprep.subr.bf16.mxu0 0
      %984 = vmatpush1.bf16.msra.mxu0 0
      %985 = vmatprep.subr.bf16.mxu0 0
      %986 = vmatpush1.bf16.msra.mxu0 0
      %987 = vmatprep.subr.bf16.mxu0 0
      %988 = vmatpush1.bf16.msra.mxu0 0
      %989 = vmatprep.subr.bf16.mxu0 0
      %990 = vmatpush1.bf16.msra.mxu0 0
      %991 = vmatprep.subr.bf16.mxu0 0
      %992 = vmatpush1.bf16.msra.mxu0 0
      %993 = vmatprep.subr.bf16.mxu0 0
      %994 = vmatpush1.bf16.msra.mxu0 0
      %995 = vmatprep.mubr.bf16.mxu0 0
      %996 = vmatmul.mubr.bf16.gmra.mrb[0].mxu0 %v951
      %v997 = vpop.f32.mrb[0].mxu0
      %v998 = vadd.f32 %v907, %v997
      %v999 = vpop.f32.mrb[0].mxu0
      %v1000 = vadd.f32 %v907, %v999
      %v1001 = vpop.f32.mrb[0].mxu0
      %v1002 = vpop.f32.mrb[0].mxu0
      %1003 = vdwg.mxu0
      %1004 = vmatprep.subr.bf16.mxu0 0
      %1005 = vmatpush1.bf16.msra.mxu0 %v936
      %1006 = vmatprep.subr.bf16.mxu0 0
      %1007 = vmatpush1.bf16.msra.mxu0 %v939
      %1008 = vmatprep.subr.bf16.mxu0 0
      %1009 = vmatpush1.bf16.msra.mxu0 %v961
      %1010 = vmatprep.subr.bf16.mxu0 0
      %1011 = vmatpush1.bf16.msra.mxu0 0
      %1012 = vmatprep.subr.bf16.mxu0 0
      %1013 = vmatpush1.bf16.msra.mxu0 0
      %1014 = vmatprep.subr.bf16.mxu0 0
      %1015 = vmatpush1.bf16.msra.mxu0 0
      %1016 = vmatprep.subr.bf16.mxu0 0
      %1017 = vmatpush1.bf16.msra.mxu0 0
      %1018 = vmatprep.subr.bf16.mxu0 0
      %1019 = vmatpush1.bf16.msra.mxu0 0
      %1020 = vmatprep.subr.bf16.mxu0 0
      %1021 = vmatpush1.bf16.msra.mxu0 0
      %1022 = vmatprep.subr.bf16.mxu0 0
      %1023 = vmatpush1.bf16.msra.mxu0 0
      %1024 = vmatprep.subr.bf16.mxu0 0
      %1025 = vmatpush1.bf16.msra.mxu0 0
      %1026 = vmatprep.subr.bf16.mxu0 0
      %1027 = vmatpush1.bf16.msra.mxu0 0
      %1028 = vmatprep.subr.bf16.mxu0 0
      %1029 = vmatpush1.bf16.msra.mxu0 0
      %1030 = vmatprep.subr.bf16.mxu0 0
      %1031 = vmatpush1.bf16.msra.mxu0 0
      %1032 = vmatprep.subr.bf16.mxu0 0
      %1033 = vmatpush1.bf16.msra.mxu0 0
      %1034 = vmatprep.subr.bf16.mxu0 0
      %1035 = vmatpush1.bf16.msra.mxu0 0
      %1036 = vmatprep.mubr.bf16.mxu0 0
      %1037 = vmatmul.mubr.bf16.gmra.mrb[0].mxu0 %v951
      %v1038 = vpop.f32.mrb[0].mxu0
      %v1039 = vadd.f32 %v907, %v1038
      %v1040 = vpop.f32.mrb[0].mxu0
      %v1041 = vpop.f32.mrb[0].mxu0
      %v1042 = vpop.f32.mrb[0].mxu0
      %1043 = vdwg.mxu0
      %v1044 = vld [vmem:[%s528] sm:$0xff]
      %v1045 = vld [vmem:[%s528 + $0x8] sm:$0xff]
      %v1046 = vld [vmem:[%s528 + $0x10] sm:$0xff]
      %v1047 = vld [vmem:[%s533] sm:$0xff]
      %v1048 = vld [vmem:[%s533 + $0x8] sm:$0xf]
      %v1049 = vmul.f32 %v1044, 0.7310586
      %v1050 = vmul.f32 %v1045, 0.7310586
      %v1051 = vmul.f32 %v1046, 0.7310586
      %v1052 = vunpack.c.l.bf16 %v1047
      %v1053 = vunpack.c.h.bf16 %v1047
      %v1054 = vunpack.c.l.bf16 %v1048
      %v1055 = vsub.f32 1.0, %v1052
      %v1056 = vsub.f32 1.0, %v1053
      %v1057 = vsub.f32 1.0, %v1054
      %v1058 = vmul.f32 %v1049, %v1055
      %v1059 = vmul.f32 %v1050, %v1056
      %v1060 = vmul.f32 %v1051, %v1057
      %v1061 = vadd.f32 %v1058, %v998
      %v1062 = vadd.f32 %v1059, %v1000
      %v1063 = vadd.f32 %v1060, %v1039
      %vm1064 = vcmp.ge.f32.partialorder %v1061, 0.0
      %vm1065 = vcmp.ge.f32.partialorder %v1062, 0.0
      %vm1066 = vcmp.ge.f32.partialorder %v1063, 0.0
      %v1067 = vsel %vm621, 1, 0
      %v1068 = vsel %vm622, 1, 0
      %v1069 = vsel %vm623, 1, 0
      %vm1070 = vcmp.eq.s32.totalorder %v1067, 1
      %vm1071 = vcmp.eq.s32.totalorder %v1068, 1
      %vm1072 = vcmp.eq.s32.totalorder %v1069, 1
      %vm1073 = vmand %vm1064, %vm1070
      %vm1074 = vmand %vm1065, %vm1071
      %vm1075 = vmand %vm1066, %vm1072
      %v1076 = vsel %vm1073, 1.0, 0.0
      %v1077 = vsel %vm1074, 1.0, 0.0
      %v1078 = vsel %vm1075, 1.0, 0.0
      %v1079 = vpack.c.bf16 %v1076, %v1076
      %v1080 = vpack.c.bf16 %v1077, %v1077
      %v1081 = vpack.c.bf16 %v1078, %v1078
      %1082 = vst [vmem:[%s548] sm:$0xff] %v1061
      %1083 = vst [vmem:[%s548 + $0x8] sm:$0xff] %v1062
      %vm1084 = vcmask 130048
      %1085 = vst.msk [vmem:[%s548 + $0x10] sm:$0xff] %vm1084, %v1063
      %v1089 = vunpack.c.l.b16 %v1079
      %v1090 = vunpack.c.l.b16 %v1080
      %v1091 = vunpack.c.l.b16 %v1081
      %v1092 = vpack.c.b16 %v1090, %v1089
      %v1093 = vpack.c.b16 %v1091, %v1091
      %1096 = vst [vmem:[%s553] sm:$0xff] %v1092
      %vm1097 = vcmask 125952
      %1098 = vst.msk [vmem:[%s553 + $0x8] sm:$0xf] %vm1097, %v1093
      %1099 = vrot.lane.b32.xlu0 %v1092, 18
      %v1100 = vpop.permute.xlu0 %1099
      %1101 = vrot.lane.b32.xlu0 %v1093, 18
      %v1102 = vpop.permute.xlu0 %1101
      %v1103 = vrot.slane %v1100, 4
      %vm1104 = vcmask 146432
      %v1105 = vsel %vm1104, %v1103, %v1100
      %v1106 = vsel %vm1104, %v1103, %v1102
      %vm1109 = vcmask 1043600
      %vm1110 = vcmask 1047556
      %vm1111 = vmor %vm1110, %vm1109
      %1112 = vst.msk [vmem:[#allocation2] sm:$0xff] %vm1111, %v1105
      %vm1113 = vcmask 273408
      %1114 = vst.msk [vmem:[#allocation2 + $0x8] sm:$0xf] %vm1113, %v1106
      %s1115 = scalar_lea.vmem %s3, 8
      %v1116 = vld [vmem:[%s1115] sm:$0xff]
      %v1117 = vld [vmem:[#allocation2] sm:$0xff]
      %v1118 = vld [vmem:[#allocation2 + $0x8] sm:$0xf]
      %1119 = vst [vmem:[#allocation4] sm:$0xff] %v1117
      %1120 = vst.msk [vmem:[#allocation4 + $0x8] sm:$0xf] %vm1097, %v1118
      %v1121 = vld [vmem:[#allocation2] sm:$0xff]
      %v1122 = vld [vmem:[#allocation2 + $0x8] sm:$0xf]
      %1125 = vrot.lane.b32.xlu0 %v1121, 127
      %v1126 = vpop.permute.xlu0 %1125
      %1127 = vrot.lane.b32.xlu0 %v1122, 127
      %v1128 = vpop.permute.xlu0 %1127
      %v1129 = vrot.slane %v1126, 4
      %v1130 = vrot.slane %v1128, 4
      %v1131 = vsel %vm674, %v1129, %v1130
      %v1132 = vsel %vm676, %v1126, %v1131
      %1135 = vst [vmem:[#allocation4 + $0xc] sm:$0xff] %v1132
      %1136 = vst.msk [vmem:[#allocation4 + $0x14] sm:$0xf] %vm1097, %v1128
      %v1137 = vld [vmem:[#allocation2] sm:$0xff]
      %v1138 = vld [vmem:[#allocation2 + $0x8] sm:$0xf]
      %1141 = vrot.lane.b32.xlu0 %v1137, 126
      %v1142 = vpop.permute.xlu0 %1141
      %1143 = vrot.lane.b32.xlu0 %v1138, 126
      %v1144 = vpop.permute.xlu0 %1143
      %v1145 = vrot.slane %v1142, 4
      %v1146 = vrot.slane %v1144, 4
      %v1147 = vsel %vm674, %v1145, %v1146
      %v1148 = vsel %vm707, %v1142, %v1147
      %1151 = vst [vmem:[#allocation4 + $0x18] sm:$0xff] %v1148
      %1152 = vst.msk [vmem:[#allocation4 + $0x20] sm:$0xf] %vm1097, %v1144
      %v1153 = vld [vmem:[#allocation2] sm:$0xff]
      %v1154 = vld [vmem:[#allocation2 + $0x8] sm:$0xf]
      %1157 = vrot.lane.b32.xlu0 %v1153, 111
      %v1158 = vpop.permute.xlu0 %1157
      %1159 = vrot.lane.b32.xlu0 %v1154, 111
      %v1160 = vpop.permute.xlu0 %1159
      %v1161 = vrot.slane %v1158, 4
      %v1162 = vrot.slane %v1160, 4
      %v1163 = vsel %vm674, %v1161, %v1162
      %v1164 = vsel %vm737, %v1158, %v1163
      %1167 = vst [vmem:[#allocation4 + $0x24] sm:$0xff] %v1164
      %1168 = vst.msk [vmem:[#allocation4 + $0x2c] sm:$0xf] %vm1097, %v1160
      %v1169 = vld [vmem:[#allocation2] sm:$0xff]
      %v1170 = vld [vmem:[#allocation2 + $0x8] sm:$0xf]
      %1173 = vrot.lane.b32.xlu0 %v1169, 110
      %v1174 = vpop.permute.xlu0 %1173
      %1175 = vrot.lane.b32.xlu0 %v1170, 110
      %v1176 = vpop.permute.xlu0 %1175
      %v1177 = vrot.slane %v1174, 4
      %v1178 = vrot.slane %v1176, 4
      %v1179 = vsel %vm674, %v1177, %v1178
      %v1180 = vsel %vm767, %v1174, %v1179
      %1183 = vst [vmem:[#allocation4 + $0x30] sm:$0xff] %v1180
      %1184 = vst.msk [vmem:[#allocation4 + $0x38] sm:$0xf] %vm1097, %v1176
      %v1185 = vld [vmem:[#allocation2] sm:$0xff]
      %v1186 = vld [vmem:[#allocation2 + $0x8] sm:$0xf]
      %1189 = vrot.lane.b32.xlu0 %v1185, 109
      %v1190 = vpop.permute.xlu0 %1189
      %1191 = vrot.lane.b32.xlu0 %v1186, 109
      %v1192 = vpop.permute.xlu0 %1191
      %v1193 = vrot.slane %v1190, 4
      %v1194 = vrot.slane %v1192, 4
      %v1195 = vsel %vm674, %v1193, %v1194
      %v1196 = vsel %vm797, %v1190, %v1195
      %1199 = vst [vmem:[#allocation4 + $0x3c] sm:$0xff] %v1196
      %1200 = vst.msk [vmem:[#allocation4 + $0x44] sm:$0xf] %vm1097, %v1192
      %v1201 = vld [vmem:[#allocation2] sm:$0xff]
      %v1202 = vld [vmem:[#allocation2 + $0x8] sm:$0xf]
      %1205 = vrot.lane.b32.xlu0 %v1201, 94
      %v1206 = vpop.permute.xlu0 %1205
      %1207 = vrot.lane.b32.xlu0 %v1202, 94
      %v1208 = vpop.permute.xlu0 %1207
      %v1209 = vrot.slane %v1206, 4
      %v1210 = vrot.slane %v1208, 4
      %v1211 = vsel %vm674, %v1209, %v1210
      %v1212 = vsel %vm827, %v1206, %v1211
      %1215 = vst [vmem:[#allocation4 + $0x48] sm:$0xff] %v1212
      %1216 = vst.msk [vmem:[#allocation4 + $0x50] sm:$0xf] %vm1097, %v1208
      %v1217 = vld [vmem:[#allocation2] sm:$0xff]
      %v1218 = vld [vmem:[#allocation2 + $0x8] sm:$0xf]
      %1221 = vrot.lane.b32.xlu0 %v1217, 93
      %v1222 = vpop.permute.xlu0 %1221
      %1223 = vrot.lane.b32.xlu0 %v1218, 93
      %v1224 = vpop.permute.xlu0 %1223
      %v1225 = vrot.slane %v1222, 4
      %v1226 = vrot.slane %v1224, 4
      %v1227 = vsel %vm674, %v1225, %v1226
      %v1228 = vsel %vm857, %v1222, %v1227
      %1231 = vst [vmem:[#allocation4 + $0x54] sm:$0xff] %v1228
      %1232 = vst.msk [vmem:[#allocation4 + $0x5c] sm:$0xf] %vm1097, %v1224
      %v1233 = vld [vmem:[#allocation2] sm:$0xff]
      %v1234 = vld [vmem:[#allocation2 + $0x8] sm:$0xf]
      %1237 = vrot.lane.b32.xlu0 %v1233, 92
      %v1238 = vpop.permute.xlu0 %1237
      %1239 = vrot.lane.b32.xlu0 %v1234, 92
      %v1240 = vpop.permute.xlu0 %1239
      %v1241 = vrot.slane %v1238, 4
      %v1242 = vrot.slane %v1240, 4
      %v1243 = vsel %vm674, %v1241, %v1242
      %v1244 = vsel %vm887, %v1238, %v1243
      %1247 = vst [vmem:[#allocation4 + $0x60] sm:$0xff] %v1244
      %1248 = vst.msk [vmem:[#allocation4 + $0x68] sm:$0xf] %vm1097, %v1240
      %v1249 = vld [vmem:[%s2] sm:$0xf]
      %v1250 = vld [vmem:[#allocation4] sm:$0xff]
      %v1251 = vld [vmem:[#allocation4 + $0x8] sm:$0xf]
      %v1252 = vld [vmem:[#allocation4 + $0xc] sm:$0xff]
      %v1253 = vld [vmem:[#allocation4 + $0x14] sm:$0xf]
      %v1254 = vld [vmem:[#allocation4 + $0x18] sm:$0xff]
      %v1255 = vld [vmem:[#allocation4 + $0x20] sm:$0xf]
      %v1256 = vld [vmem:[#allocation4 + $0x24] sm:$0xff]
      %v1257 = vld [vmem:[#allocation4 + $0x2c] sm:$0xf]
      %v1258 = vld [vmem:[#allocation4 + $0x30] sm:$0xff]
      %v1259 = vld [vmem:[#allocation4 + $0x38] sm:$0xf]
      %v1260 = vld [vmem:[#allocation4 + $0x3c] sm:$0xff]
      %v1261 = vld [vmem:[#allocation4 + $0x44] sm:$0xf]
      %v1262 = vld [vmem:[#allocation4 + $0x48] sm:$0xff]
      %v1263 = vld [vmem:[#allocation4 + $0x50] sm:$0xf]
      %v1264 = vld [vmem:[#allocation4 + $0x54] sm:$0xff]
      %v1265 = vld [vmem:[#allocation4 + $0x5c] sm:$0xf]
      %v1266 = vld [vmem:[#allocation4 + $0x60] sm:$0xff]
      %v1267 = vld [vmem:[#allocation4 + $0x68] sm:$0xf]
      %1269 = vset.pattern.permute.xlu0 0
      %1270 = vperm.xlu0 %1269, %v1116
      %v1271 = vpop.permute.xlu0 %1270
      %v1291 = vunpack.c.l.b16 %v1250
      %v1292 = vunpack.c.h.b16 %v1250
      %v1293 = vunpack.c.l.b16 %v1251
      %v1294 = vunpack.c.l.b16 %v1252
      %v1295 = vunpack.c.h.b16 %v1252
      %v1296 = vunpack.c.l.b16 %v1253
      %v1297 = vunpack.c.l.b16 %v1254
      %v1298 = vunpack.c.h.b16 %v1254
      %v1299 = vunpack.c.l.b16 %v1255
      %v1300 = vunpack.c.l.b16 %v1256
      %v1301 = vunpack.c.h.b16 %v1256
      %v1302 = vunpack.c.l.b16 %v1257
      %v1303 = vunpack.c.l.b16 %v1258
      %v1304 = vunpack.c.h.b16 %v1258
      %v1305 = vunpack.c.l.b16 %v1259
      %v1306 = vunpack.c.l.b16 %v1260
      %v1307 = vunpack.c.h.b16 %v1260
      %v1308 = vunpack.c.l.b16 %v1261
      %v1309 = vunpack.c.l.b16 %v1262
      %v1310 = vunpack.c.h.b16 %v1262
      %v1311 = vunpack.c.l.b16 %v1263
      %v1312 = vunpack.c.l.b16 %v1264
      %v1313 = vunpack.c.h.b16 %v1264
      %v1314 = vunpack.c.l.b16 %v1265
      %v1315 = vunpack.c.l.b16 %v1266
      %v1316 = vunpack.c.h.b16 %v1266
      %v1317 = vunpack.c.l.b16 %v1267
      %v1318 = vpack.c.b16 %v1294, %v1291
      %v1319 = vpack.c.b16 %v1295, %v1292
      %v1320 = vpack.c.b16 %v1296, %v1293
      %v1321 = vpack.c.b16 %v1300, %v1297
      %v1322 = vpack.c.b16 %v1301, %v1298
      %v1323 = vpack.c.b16 %v1302, %v1299
      %v1324 = vpack.c.b16 %v1306, %v1303
      %v1325 = vpack.c.b16 %v1307, %v1304
      %v1326 = vpack.c.b16 %v1308, %v1305
      %v1327 = vpack.c.b16 %v1312, %v1309
      %v1328 = vpack.c.b16 %v1313, %v1310
      %v1329 = vpack.c.b16 %v1314, %v1311
      %v1330 = vpack.c.b16 %v1315, %v1315
      %v1331 = vpack.c.b16 %v1316, %v1316
      %v1332 = vpack.c.b16 %v1317, %v1317
      %vm1345 = vcmask 588800
      %v1347 = vsel %vm1345, %v1249, 0
      %vm1349 = vcmask 1043456
      %v1351 = vsel %vm1349, %v1330, 0
      %v1354 = vsel %vm1349, %v1331, 0
      %v1357 = vsel %vm1349, %v1332, 0
      %1359 = vmatprep.subr.bf16.mxu0 %v1319
      %1360 = vmatpush1.bf16.msra.mxu0 %v1318
      %1361 = vmatprep.subr.bf16.mxu0 %v1322
      %1362 = vmatpush1.bf16.msra.mxu0 %v1321
      %1363 = vmatprep.subr.bf16.mxu0 %v1325
      %1364 = vmatpush1.bf16.msra.mxu0 %v1324
      %1365 = vmatprep.subr.bf16.mxu0 %v1328
      %1366 = vmatpush1.bf16.msra.mxu0 %v1327
      %1367 = vmatprep.subr.bf16.mxu0 %v1354
      %1368 = vmatpush1.bf16.msra.mxu0 %v1351
      %1369 = vmatprep.subr.bf16.mxu0 0
      %1370 = vmatpush1.bf16.msra.mxu0 0
      %1371 = vmatprep.subr.bf16.mxu0 0
      %1372 = vmatpush1.bf16.msra.mxu0 0
      %1373 = vmatprep.subr.bf16.mxu0 0
      %1374 = vmatpush1.bf16.msra.mxu0 0
      %1375 = vmatprep.subr.bf16.mxu0 0
      %1376 = vmatpush1.bf16.msra.mxu0 0
      %1377 = vmatprep.subr.bf16.mxu0 0
      %1378 = vmatpush1.bf16.msra.mxu0 0
      %1379 = vmatprep.subr.bf16.mxu0 0
      %1380 = vmatpush1.bf16.msra.mxu0 0
      %1381 = vmatprep.subr.bf16.mxu0 0
      %1382 = vmatpush1.bf16.msra.mxu0 0
      %1383 = vmatprep.subr.bf16.mxu0 0
      %1384 = vmatpush1.bf16.msra.mxu0 0
      %1385 = vmatprep.subr.bf16.mxu0 0
      %1386 = vmatpush1.bf16.msra.mxu0 0
      %1387 = vmatprep.subr.bf16.mxu0 0
      %1388 = vmatpush1.bf16.msra.mxu0 0
      %1389 = vmatprep.subr.bf16.mxu0 0
      %1390 = vmatpush1.bf16.msra.mxu0 0
      %1391 = vmatprep.mubr.bf16.mxu0 0
      %1392 = vmatmul.mubr.bf16.gmra.mrb[0].mxu0 %v1347
      %v1393 = vpop.f32.mrb[0].mxu0
      %v1394 = vadd.f32 %v1271, %v1393
      %v1395 = vpop.f32.mrb[0].mxu0
      %v1396 = vadd.f32 %v1271, %v1395
      %v1397 = vpop.f32.mrb[0].mxu0
      %v1398 = vpop.f32.mrb[0].mxu0
      %1399 = vdwg.mxu0
      %1400 = vmatprep.subr.bf16.mxu0 0
      %1401 = vmatpush1.bf16.msra.mxu0 %v1320
      %1402 = vmatprep.subr.bf16.mxu0 0
      %1403 = vmatpush1.bf16.msra.mxu0 %v1323
      %1404 = vmatprep.subr.bf16.mxu0 0
      %1405 = vmatpush1.bf16.msra.mxu0 %v1326
      %1406 = vmatprep.subr.bf16.mxu0 0
      %1407 = vmatpush1.bf16.msra.mxu0 %v1329
      %1408 = vmatprep.subr.bf16.mxu0 0
      %1409 = vmatpush1.bf16.msra.mxu0 %v1357
      %1410 = vmatprep.subr.bf16.mxu0 0
      %1411 = vmatpush1.bf16.msra.mxu0 0
      %1412 = vmatprep.subr.bf16.mxu0 0
      %1413 = vmatpush1.bf16.msra.mxu0 0
      %1414 = vmatprep.subr.bf16.mxu0 0
      %1415 = vmatpush1.bf16.msra.mxu0 0
      %1416 = vmatprep.subr.bf16.mxu0 0
      %1417 = vmatpush1.bf16.msra.mxu0 0
      %1418 = vmatprep.subr.bf16.mxu0 0
      %1419 = vmatpush1.bf16.msra.mxu0 0
      %1420 = vmatprep.subr.bf16.mxu0 0
      %1421 = vmatpush1.bf16.msra.mxu0 0
      %1422 = vmatprep.subr.bf16.mxu0 0
      %1423 = vmatpush1.bf16.msra.mxu0 0
      %1424 = vmatprep.subr.bf16.mxu0 0
      %1425 = vmatpush1.bf16.msra.mxu0 0
      %1426 = vmatprep.subr.bf16.mxu0 0
      %1427 = vmatpush1.bf16.msra.mxu0 0
      %1428 = vmatprep.subr.bf16.mxu0 0
      %1429 = vmatpush1.bf16.msra.mxu0 0
      %1430 = vmatprep.subr.bf16.mxu0 0
      %1431 = vmatpush1.bf16.msra.mxu0 0
      %1432 = vmatprep.mubr.bf16.mxu0 0
      %1433 = vmatmul.mubr.bf16.gmra.mrb[0].mxu0 %v1347
      %v1434 = vpop.f32.mrb[0].mxu0
      %v1435 = vadd.f32 %v1271, %v1434
      %v1436 = vpop.f32.mrb[0].mxu0
      %v1437 = vpop.f32.mrb[0].mxu0
      %v1438 = vpop.f32.mrb[0].mxu0
      %1439 = vdwg.mxu0
      %v1440 = vld [vmem:[%s538] sm:$0xff]
      %v1441 = vld [vmem:[%s538 + $0x8] sm:$0xff]
      %v1442 = vld [vmem:[%s538 + $0x10] sm:$0xff]
      %v1443 = vld [vmem:[%s543] sm:$0xff]
      %v1444 = vld [vmem:[%s543 + $0x8] sm:$0xf]
      %v1445 = vmul.f32 %v1440, 0.7310586
      %v1446 = vmul.f32 %v1441, 0.7310586
      %v1447 = vmul.f32 %v1442, 0.7310586
      %v1448 = vunpack.c.l.bf16 %v1443
      %v1449 = vunpack.c.h.bf16 %v1443
      %v1450 = vunpack.c.l.bf16 %v1444
      %v1451 = vsub.f32 1.0, %v1448
      %v1452 = vsub.f32 1.0, %v1449
      %v1453 = vsub.f32 1.0, %v1450
      %v1454 = vmul.f32 %v1445, %v1451
      %v1455 = vmul.f32 %v1446, %v1452
      %v1456 = vmul.f32 %v1447, %v1453
      %v1457 = vadd.f32 %v1454, %v1394
      %v1458 = vadd.f32 %v1455, %v1396
      %v1459 = vadd.f32 %v1456, %v1435
      %vm1460 = vcmp.ge.f32.partialorder %v1457, 0.0
      %vm1461 = vcmp.ge.f32.partialorder %v1458, 0.0
      %vm1462 = vcmp.ge.f32.partialorder %v1459, 0.0
      %vm1463 = vmand %vm1460, %vm1070
      %vm1464 = vmand %vm1461, %vm1071
      %vm1465 = vmand %vm1462, %vm1072
      %v1466 = vsel %vm1463, 1.0, 0.0
      %v1467 = vsel %vm1464, 1.0, 0.0
      %v1468 = vsel %vm1465, 1.0, 0.0
      %v1469 = vpack.c.bf16 %v1466, %v1466
      %v1470 = vpack.c.bf16 %v1467, %v1467
      %v1471 = vpack.c.bf16 %v1468, %v1468
      %1472 = vst [vmem:[%s558] sm:$0xff] %v1457
      %1473 = vst [vmem:[%s558 + $0x8] sm:$0xff] %v1458
      %1474 = vst.msk [vmem:[%s558 + $0x10] sm:$0xff] %vm1084, %v1459
      %v1478 = vunpack.c.l.b16 %v1469
      %v1479 = vunpack.c.l.b16 %v1470
      %v1480 = vunpack.c.l.b16 %v1471
      %v1481 = vpack.c.b16 %v1479, %v1478
      %v1482 = vpack.c.b16 %v1480, %v1480
      %1485 = vst [vmem:[%s563] sm:$0xff] %v1481
      %1486 = vst.msk [vmem:[%s563 + $0x8] sm:$0xf] %vm1097, %v1482
      %v1487 = vld [vmem:[%s8] sm:$0xf]
      %v1488 = vld [vmem:[%s8 + $0x4] sm:$0xf]
      %v1489 = vld [vmem:[%s8 + $0x8] sm:$0xf]
      %v1490 = vld [vmem:[%s8 + $0xc] sm:$0xf]
      %v1491 = vld [vmem:[%s8 + $0x10] sm:$0xf]
      %v1492 = vld [vmem:[%s8 + $0x14] sm:$0xf]
      %v1493 = vld [vmem:[%s8 + $0x18] sm:$0xf]
      %v1494 = vld [vmem:[%s8 + $0x1c] sm:$0xf]
      %v1495 = vld [vmem:[%s8 + $0x20] sm:$0xf]
      %v1496 = vld [vmem:[%s8 + $0x24] sm:$0xf]
      %v1497 = vld [vmem:[%s8 + $0x28] sm:$0xf]
      %v1498 = vld [vmem:[%s8 + $0x2c] sm:$0xf]
      %v1499 = vld [vmem:[%s8 + $0x30] sm:$0xf]
      %v1500 = vld [vmem:[%s8 + $0x34] sm:$0xf]
      %v1501 = vld [vmem:[%s8 + $0x38] sm:$0xf]
      %v1502 = vld [vmem:[%s8 + $0x3c] sm:$0xf]
      %v1503 = vld [vmem:[%s8 + $0x40] sm:$0xf]
      %v1504 = vld [vmem:[%s8 + $0x44] sm:$0xf]
      %v1505 = vld [vmem:[%s8 + $0x48] sm:$0xf]
      %v1506 = vld [vmem:[%s8 + $0x4c] sm:$0xf]
      %v1507 = vld [vmem:[%s8 + $0x50] sm:$0xf]
      %v1508 = vld [vmem:[%s8 + $0x54] sm:$0xf]
      %v1509 = vld [vmem:[%s8 + $0x58] sm:$0xf]
      %v1510 = vld [vmem:[%s8 + $0x5c] sm:$0xf]
      %v1511 = vld [vmem:[%s8 + $0x60] sm:$0xf]
      %v1512 = vld [vmem:[%s8 + $0x64] sm:$0xf]
      %v1513 = vld [vmem:[%s8 + $0x68] sm:$0xf]
      %v1514 = vld [vmem:[%s8 + $0x6c] sm:$0xf]
      %v1515 = vld [vmem:[%s8 + $0x70] sm:$0xf]
      %v1516 = vld [vmem:[%s8 + $0x74] sm:$0xf]
      %v1517 = vld [vmem:[%s8 + $0x78] sm:$0xf]
      %v1518 = vld [vmem:[%s8 + $0x7c] sm:$0xf]
      %v1519 = vld [vmem:[%s8 + $0x80] sm:$0xf]
      %v1520 = vld [vmem:[%s8 + $0x84] sm:$0xf]
      %v1555 = vunpack.c.l.b16 %v1487
      %v1556 = vunpack.c.l.b16 %v1488
      %v1557 = vunpack.c.l.b16 %v1489
      %v1558 = vunpack.c.l.b16 %v1490
      %v1559 = vunpack.c.l.b16 %v1491
      %v1560 = vunpack.c.l.b16 %v1492
      %v1561 = vunpack.c.l.b16 %v1493
      %v1562 = vunpack.c.l.b16 %v1494
      %v1563 = vunpack.c.l.b16 %v1495
      %v1564 = vunpack.c.l.b16 %v1496
      %v1565 = vunpack.c.l.b16 %v1497
      %v1566 = vunpack.c.l.b16 %v1498
      %v1567 = vunpack.c.l.b16 %v1499
      %v1568 = vunpack.c.l.b16 %v1500
      %v1569 = vunpack.c.l.b16 %v1501
      %v1570 = vunpack.c.l.b16 %v1502
      %v1571 = vunpack.c.l.b16 %v1503
      %v1572 = vunpack.c.l.b16 %v1504
      %v1573 = vunpack.c.l.b16 %v1505
      %v1574 = vunpack.c.l.b16 %v1506
      %v1575 = vunpack.c.l.b16 %v1507
      %v1576 = vunpack.c.l.b16 %v1508
      %v1577 = vunpack.c.l.b16 %v1509
      %v1578 = vunpack.c.l.b16 %v1510
      %v1579 = vunpack.c.l.b16 %v1511
      %v1580 = vunpack.c.l.b16 %v1512
      %v1581 = vunpack.c.l.b16 %v1513
      %v1582 = vunpack.c.l.b16 %v1514
      %v1583 = vunpack.c.l.b16 %v1515
      %v1584 = vunpack.c.l.b16 %v1516
      %v1585 = vunpack.c.l.b16 %v1517
      %v1586 = vunpack.c.l.b16 %v1518
      %v1587 = vunpack.c.l.b16 %v1519
      %v1588 = vunpack.c.l.b16 %v1520
      %v1589 = vpack.c.b16 %v1556, %v1555
      %v1590 = vpack.c.b16 %v1558, %v1557
      %v1591 = vpack.c.b16 %v1560, %v1559
      %v1592 = vpack.c.b16 %v1562, %v1561
      %v1593 = vpack.c.b16 %v1564, %v1563
      %v1594 = vpack.c.b16 %v1566, %v1565
      %v1595 = vpack.c.b16 %v1568, %v1567
      %v1596 = vpack.c.b16 %v1570, %v1569
      %v1597 = vpack.c.b16 %v1572, %v1571
      %v1598 = vpack.c.b16 %v1574, %v1573
      %v1599 = vpack.c.b16 %v1576, %v1575
      %v1600 = vpack.c.b16 %v1578, %v1577
      %v1601 = vpack.c.b16 %v1580, %v1579
      %v1602 = vpack.c.b16 %v1582, %v1581
      %v1603 = vpack.c.b16 %v1584, %v1583
      %v1604 = vpack.c.b16 %v1586, %v1585
      %v1605 = vpack.c.b16 %v1588, %v1587
      %v1624 = vsel %vm1084, %v1471, 0
      %1626 = vmatprep.subr.bf16.mxu0 0
      %1627 = vmatpush1.bf16.msra.mxu0 %v1589
      %1628 = vmatprep.subr.bf16.mxu0 0
      %1629 = vmatpush1.bf16.msra.mxu0 %v1590
      %1630 = vmatprep.subr.bf16.mxu0 0
      %1631 = vmatpush1.bf16.msra.mxu0 %v1591
      %1632 = vmatprep.subr.bf16.mxu0 0
      %1633 = vmatpush1.bf16.msra.mxu0 %v1592
      %1634 = vmatprep.subr.bf16.mxu0 0
      %1635 = vmatpush1.bf16.msra.mxu0 %v1593
      %1636 = vmatprep.subr.bf16.mxu0 0
      %1637 = vmatpush1.bf16.msra.mxu0 %v1594
      %1638 = vmatprep.subr.bf16.mxu0 0
      %1639 = vmatpush1.bf16.msra.mxu0 %v1595
      %1640 = vmatprep.subr.bf16.mxu0 0
      %1641 = vmatpush1.bf16.msra.mxu0 %v1596
      %1642 = vmatprep.subr.bf16.mxu0 0
      %1643 = vmatpush1.bf16.msra.mxu0 %v1597
      %1644 = vmatprep.subr.bf16.mxu0 0
      %1645 = vmatpush1.bf16.msra.mxu0 %v1598
      %1646 = vmatprep.subr.bf16.mxu0 0
      %1647 = vmatpush1.bf16.msra.mxu0 %v1599
      %1648 = vmatprep.subr.bf16.mxu0 0
      %1649 = vmatpush1.bf16.msra.mxu0 %v1600
      %1650 = vmatprep.subr.bf16.mxu0 0
      %1651 = vmatpush1.bf16.msra.mxu0 %v1601
      %1652 = vmatprep.subr.bf16.mxu0 0
      %1653 = vmatpush1.bf16.msra.mxu0 %v1602
      %1654 = vmatprep.subr.bf16.mxu0 0
      %1655 = vmatpush1.bf16.msra.mxu0 %v1603
      %1656 = vmatprep.subr.bf16.mxu0 0
      %1657 = vmatpush1.bf16.msra.mxu0 %v1604
      %1658 = vmatprep.mubr.bf16.mxu0 %v1470
      %1659 = vmatmul.mubr.bf16.gmra.mrb[0].mxu0 %v1469
      %v1660 = vpop.f32.mrb[0].mxu0
      %v1661 = vadd.f32 0.0, %v1660
      %v1662 = vpop.f32.mrb[0].mxu0
      %v1663 = vpop.f32.mrb[0].mxu0
      %v1664 = vpop.f32.mrb[0].mxu0
      %1665 = vdwg.mxu0
      %1666 = vmatprep.subr.bf16.mxu0 0
      %1667 = vmatpush1.bf16.msra.mxu0 %v1605
      %1668 = vmatprep.subr.bf16.mxu0 0
      %1669 = vmatpush1.bf16.msra.mxu0 0
      %1670 = vmatprep.subr.bf16.mxu0 0
      %1671 = vmatpush1.bf16.msra.mxu0 0
      %1672 = vmatprep.subr.bf16.mxu0 0
      %1673 = vmatpush1.bf16.msra.mxu0 0
      %1674 = vmatprep.subr.bf16.mxu0 0
      %1675 = vmatpush1.bf16.msra.mxu0 0
      %1676 = vmatprep.subr.bf16.mxu0 0
      %1677 = vmatpush1.bf16.msra.mxu0 0
      %1678 = vmatprep.subr.bf16.mxu0 0
      %1679 = vmatpush1.bf16.msra.mxu0 0
      %1680 = vmatprep.subr.bf16.mxu0 0
      %1681 = vmatpush1.bf16.msra.mxu0 0
      %1682 = vmatprep.subr.bf16.mxu0 0
      %1683 = vmatpush1.bf16.msra.mxu0 0
      %1684 = vmatprep.subr.bf16.mxu0 0
      %1685 = vmatpush1.bf16.msra.mxu0 0
      %1686 = vmatprep.subr.bf16.mxu0 0
      %1687 = vmatpush1.bf16.msra.mxu0 0
      %1688 = vmatprep.subr.bf16.mxu0 0
      %1689 = vmatpush1.bf16.msra.mxu0 0
      %1690 = vmatprep.subr.bf16.mxu0 0
      %1691 = vmatpush1.bf16.msra.mxu0 0
      %1692 = vmatprep.subr.bf16.mxu0 0
      %1693 = vmatpush1.bf16.msra.mxu0 0
      %1694 = vmatprep.subr.bf16.mxu0 0
      %1695 = vmatpush1.bf16.msra.mxu0 0
      %1696 = vmatprep.subr.bf16.mxu0 0
      %1697 = vmatpush1.bf16.msra.mxu0 0
      %1698 = vmatprep.mubr.bf16.mxu0 0
      %1699 = vmatmul.mubr.bf16.gmra.mrb[0].mxu0 %v1624
      %v1700 = vpop.f32.mrb[0].mxu0
      %v1701 = vadd.f32 %v1661, %v1700
      %v1702 = vpop.f32.mrb[0].mxu0
      %v1703 = vpop.f32.mrb[0].mxu0
      %v1704 = vpop.f32.mrb[0].mxu0
      %1705 = vdwg.mxu0
      %vm1706 = vcmp.gt.f32.partialorder %v1701, 0.5
      %v1707 = vsel %vm1706, 1, 0
      %v1708 = vcvt.s32.f32 %v1707
      %v1709 = vpack.c.bf16 %v1708, %v1708
      %vm1710 = vcmask 519168
      %1711 = vst.msk [vmem:[%s567] sm:$0xf] %vm1710, %v1709
      %p1712 = scmp.lt.s32.totalorder %s25, 1
      %s1713 = scalar_select %p1712, %s25, 1
      %s1714 = smul.addr %s1713, 3
      %s1715 = smul.addr %s1714, 8
      %s1716 = scalar_lea.vmem %s9, %s1715
      %p1717 = scmp.lt.s32.totalorder %s25, 1
      %s1718 = scalar_select %p1717, %s25, 1
      %s1719 = smul.addr %s1718, 3
      %s1720 = smul.addr %s1719, 4
      %s1721 = scalar_lea.vmem %s10, %s1720
      %p1722 = scmp.lt.s32.totalorder %s25, 1
      %s1723 = scalar_select %p1722, %s25, 1
      %s1724 = smul.addr %s1723, 3
      %s1725 = smul.addr %s1724, 8
      %s1726 = scalar_lea.vmem %s11, %s1725
      %p1727 = scmp.lt.s32.totalorder %s25, 1
      %s1728 = scalar_select %p1727, %s25, 1
      %s1729 = smul.addr %s1728, 3
      %s1730 = smul.addr %s1729, 4
      %s1731 = scalar_lea.vmem %s12, %s1730
      %p1732 = scmp.lt.s32.totalorder %s25, 1
      %s1733 = scalar_select %p1732, %s25, 1
      %s1734 = smul.addr %s1733, 4
      %s1735 = scalar_lea.vmem %s13, %s1734
      // Predicated region
      $region57: #{ems_block2_forward.1} parent=55 // pred_check
        %p1736 = pneg %p257
      $region58: #{ems_block2_forward.1} parent=55 // pred_check_branch
        %1738 = sbr.rel (%p1736) target = $region60
      $region59: #{ems_block2_forward.1} parent=55 // pred_region
        _
      $region60: #{ems_block2_forward.1} parent=55 // pred_fallthru
        _
      // Predicated region
      $region61: #{ems_block2_forward.1} parent=55 // pred_check
        %p1739 = pneg %p283
      $region62: #{ems_block2_forward.1} parent=55 // pred_check_branch
        %1741 = sbr.rel (%p1739) target = $region64
      $region63: #{ems_block2_forward.1} parent=55 // pred_region
        _
      $region64: #{ems_block2_forward.1} parent=55 // pred_fallthru
        _
      // Predicated region
      $region65: #{ems_block2_forward.1} parent=55 // pred_check
        %p1742 = pneg %p309
      $region66: #{ems_block2_forward.1} parent=55 // pred_check_branch
        %1744 = sbr.rel (%p1742) target = $region68
      $region67: #{ems_block2_forward.1} parent=55 // pred_region
        _
      $region68: #{ems_block2_forward.1} parent=55 // pred_fallthru
        _
      // Predicated region
      $region69: #{ems_block2_forward.1} parent=55 // pred_check
        %p1745 = pneg %p335
      $region70: #{ems_block2_forward.1} parent=55 // pred_check_branch
        %1747 = sbr.rel (%p1745) target = $region72
      $region71: #{ems_block2_forward.1} parent=55 // pred_region
        _
      $region72: #{ems_block2_forward.1} parent=55 // pred_fallthru
        _
      // Predicated region
      $region73: #{ems_block2_forward.1} parent=55 // pred_check
        %p1748 = pneg %p361
      $region74: #{ems_block2_forward.1} parent=55 // pred_check_branch
        %1750 = sbr.rel (%p1748) target = $region76
      $region75: #{ems_block2_forward.1} parent=55 // pred_region
        _
      $region76: #{ems_block2_forward.1} parent=55 // pred_fallthru
        _
    $region56: #{ems_block2_forward.1} parent=5 // pred_fallthru
      _
    %p1751 = scmp.le.s32.totalorder 2, %s20
    // Predicated region
    $region77: #{ems_block2_forward.1} parent=5 // pred_check
      %p1752 = pneg %p1751
    $region78: #{ems_block2_forward.1} parent=5 // pred_check_branch
      %1754 = sbr.rel (%p1752) target = $region80
    $region79: #{ems_block2_forward.1} parent=5 // pred_region
      %s1755 = ssub.s32 %s20, 2
      // Predicated region
      $region81: #{ems_block2_forward.1} parent=79 // pred_check
        %p1756 = pneg %p263
      $region82: #{ems_block2_forward.1} parent=79 // pred_check_branch
        %1758 = sbr.rel (%p1756) target = $region84
      $region83: #{ems_block2_forward.1} parent=79 // pred_region
        %p1759 = scmp.lt.s32.totalorder %s26, 1
        %s1760 = scalar_select %p1759, %s26, 1
        %s1761 = smul.addr %s1760, 3
        %s1762 = smul.addr %s1761, 8
        %s1763 = scalar_lea.vmem %s9, %s1762
      $region84: #{ems_block2_forward.1} parent=79 // pred_fallthru
        _
      // Predicated region
      $region85: #{ems_block2_forward.1} parent=79 // pred_check
        %p1764 = pneg %p289
      $region86: #{ems_block2_forward.1} parent=79 // pred_check_branch
        %1766 = sbr.rel (%p1764) target = $region88
      $region87: #{ems_block2_forward.1} parent=79 // pred_region
        %p1767 = scmp.lt.s32.totalorder %s26, 1
        %s1768 = scalar_select %p1767, %s26, 1
        %s1769 = smul.addr %s1768, 3
        %s1770 = smul.addr %s1769, 4
        %s1771 = scalar_lea.vmem %s10, %s1770
      $region88: #{ems_block2_forward.1} parent=79 // pred_fallthru
        _
      // Predicated region
      $region89: #{ems_block2_forward.1} parent=79 // pred_check
        %p1772 = pneg %p315
      $region90: #{ems_block2_forward.1} parent=79 // pred_check_branch
        %1774 = sbr.rel (%p1772) target = $region92
      $region91: #{ems_block2_forward.1} parent=79 // pred_region
        %p1775 = scmp.lt.s32.totalorder %s26, 1
        %s1776 = scalar_select %p1775, %s26, 1
        %s1777 = smul.addr %s1776, 3
        %s1778 = smul.addr %s1777, 8
        %s1779 = scalar_lea.vmem %s11, %s1778
      $region92: #{ems_block2_forward.1} parent=79 // pred_fallthru
        _
      // Predicated region
      $region93: #{ems_block2_forward.1} parent=79 // pred_check
        %p1780 = pneg %p341
      $region94: #{ems_block2_forward.1} parent=79 // pred_check_branch
        %1782 = sbr.rel (%p1780) target = $region96
      $region95: #{ems_block2_forward.1} parent=79 // pred_region
        %p1783 = scmp.lt.s32.totalorder %s26, 1
        %s1784 = scalar_select %p1783, %s26, 1
        %s1785 = smul.addr %s1784, 3
        %s1786 = smul.addr %s1785, 4
        %s1787 = scalar_lea.vmem %s12, %s1786
      $region96: #{ems_block2_forward.1} parent=79 // pred_fallthru
        _
      // Predicated region
      $region97: #{ems_block2_forward.1} parent=79 // pred_check
        %p1788 = pneg %p367
      $region98: #{ems_block2_forward.1} parent=79 // pred_check_branch
        %1790 = sbr.rel (%p1788) target = $region100
      $region99: #{ems_block2_forward.1} parent=79 // pred_region
        %p1791 = scmp.lt.s32.totalorder %s26, 1
        %s1792 = scalar_select %p1791, %s26, 1
        %s1793 = smul.addr %s1792, 4
        %s1794 = scalar_lea.vmem %s13, %s1793
      $region100: #{ems_block2_forward.1} parent=79 // pred_fallthru
        _
    $region80: #{ems_block2_forward.1} parent=5 // pred_fallthru
      _
  $region6: #{ems_block2_forward.1} parent=0 // loop_footer
    %s24 = sadd.s32 1, %s20
  $region7: #{ems_block2_forward.1} parent=0 // loop_footer_branch
    %19 = sbr.rel target = $region3
  $region8: #{ems_block2_forward.1} parent=0 // loop_exit
    _

</llo_original>
